<compile_context>
chip_gen: v7x
topology: tpu7x:2x2x1
jax: 0.10.0
libtpu: 0.0.40
codegen_flags: <defaults>
</compile_context>

<pallas_src>
import functools

import jax
import jax.numpy as jnp
from jax.experimental import pallas as pl
from jax.experimental.pallas import tpu as pltpu

LEAKY_SLOPE = 0.2
EPS = 1e-5


def _round_up(x, m):
    return (x + m - 1) // m * m


def _conv_stats_kernel(xp_ref, w_ref, mask_ref, y_ref, stats_ref, *, offs, st_pad):
    """Pass 1: conv tile (offset-accumulated bf16 matmuls) + masked sum / sumsq.

    xp_ref:    (8, C_in, Lt_pad)  bf16  parity-split padded-input slab for this (n, d-tile)
    w_ref:     (8, C_out, 8*C_in) bf16  weights grouped as (parity, c_out, shift*c_in)
    mask_ref:  (1, St_pad)        f32   1.0 on valid output positions of this tile
    y_ref:     (C_out, St_pad)    f32   pre-norm conv output tile (lane-dense)
    stats_ref: (C_out, 2)         f32   [sum, sum of squares] over valid positions
    """
    acc = jnp.zeros(y_ref.shape, jnp.float32)
    for p in range(xp_ref.shape[0]):                      # 8 parities, unrolled
        slab = xp_ref[p]                                  # (C_in, Lt_pad) bf16
        # 8 intra-parity shifts -> (8*C_in, St_pad) RHS, one MXU matmul per parity.
        rhs = jnp.concatenate([slab[:, off:off + st_pad] for off in offs], axis=0)
        acc = acc + jnp.dot(w_ref[p], rhs, preferred_element_type=jnp.float32)
    mask = mask_ref[...]                                  # (1, St_pad)
    ym = acc * mask
    ssum = jnp.sum(ym, axis=1, keepdims=True)             # (C_out, 1)
    ssq = jnp.sum(ym * acc, axis=1, keepdims=True)        # (C_out, 1)  sum(y^2 * mask)
    y_ref[...] = acc
    stats_ref[...] = jnp.concatenate([ssum, ssq], axis=1)


def _norm_act_kernel(y_ref, prm_ref, o_ref):
    """Pass 2: InstanceNorm with precomputed (mean, 1/std) + LeakyReLU(0.2)."""
    y = y_ref[...]                                        # (C_out, St_pad) f32
    mean = prm_ref[:, 0:1]                                # (C_out, 1)
    scale = prm_ref[:, 1:2]                               # (C_out, 1)
    yn = (y - mean) * scale
    o_ref[...] = jnp.where(yn >= 0, yn, LEAKY_SLOPE * yn).astype(o_ref.dtype)


def unet_down(x, weight, normalize=True, dropout=0.0, d_tile=None):
    """x: (N, C_in, D, H, W) f32, weight: (C_out, C_in, 4, 4, 4) f32 -> (N, C_out, D/2, H/2, W/2)."""
    assert dropout == 0.0  # TODO(synk): Dropout path (train-time only, default 0.0) not implemented.
    n, c_in, d, h, w = x.shape
    c_out = weight.shape[0]
    assert d % 2 == 0 and h % 2 == 0 and w % 2 == 0, "even spatial dims required for k=4,s=2,p=1"
    do, ho, wo = d // 2, h // 2, w // 2
    w1, h1 = wo + 1, ho + 1
    hw1 = h1 * w1
    max_off = hw1 + w1 + 1

    # ---- pick the output-depth tile (largest divisor of Do whose working set is modest) ----
    if d_tile is None:
        d_tile = 1
        for cand in range(do, 0, -1):
            if do % cand:
                continue
            st_p = _round_up(cand * hw1, 128)
            lt_p = _round_up(max((cand + 2) * hw1, st_p + max_off), 128)
            need = 2 * (8 * c_in * lt_p * 2 + c_out * st_p * 4) \
                + 3 * c_out * st_p * 4 + 8 * c_in * st_p * 2
            if need <= 8 * 1024 * 1024:
                d_tile = cand
                break
    assert do % d_tile == 0, (do, d_tile)
    n_dt = do // d_tile

    st = d_tile * hw1                       # tile positions on the (Dt, Ho+1, Wo+1) parity grid
    st_pad = _round_up(st, 128)             # lane-dense tile width
    lt_nat = (d_tile + 2) * hw1
    lt_pad = _round_up(max(lt_nat, st_pad + max_off), 128)

    # ---- parity-decompose the zero-padded input (bf16, ~1x bytes; no 64x im2col) ----
    x_pad = jnp.pad(x.astype(jnp.bfloat16), ((0, 0), (0, 0), (1, 1), (1, 1), (1, 1)))
    xp = x_pad.reshape(n, c_in, do + 1, 2, ho + 1, 2, wo + 1, 2)
    xp = jnp.transpose(xp, (0, 3, 5, 7, 1, 2, 4, 6))      # (N, pd, ph, pw, C_in, Do+1, Ho+1, Wo+1)
    xp = xp.reshape(n, 8, c_in, do + 1, h1, w1)
    xp = jnp.pad(xp, ((0, 0),) * 3 + ((0, 1), (0, 0), (0, 0)))   # spare d-plane for slice slack

    # per-d-tile slabs with a 2-plane halo, flattened spatial, lane padded
    slabs = [xp[:, :, :, t * d_tile: t * d_tile + d_tile + 2] for t in range(n_dt)]
    xpt = jnp.stack(slabs, axis=1)                        # (N, n_dt, 8, C_in, Dt+2, Ho+1, Wo+1)
    xpt = xpt.reshape(n, n_dt, 8, c_in, lt_nat)
    xpt = jnp.pad(xpt, ((0, 0),) * 4 + ((0, lt_pad - lt_nat),))

    # ---- weights: (C_out, C_in, 4, 4, 4) -> (parity, C_out, shift*C_in), bf16 ----
    w8 = weight.reshape(c_out, c_in, 2, 2, 2, 2, 2, 2)    # (co, ci, qd, pd, qh, ph, qw, pw)
    w8 = jnp.transpose(w8, (3, 5, 7, 0, 2, 4, 6, 1))      # (pd, ph, pw, co, qd, qh, qw, ci)
    w_r = w8.reshape(8, c_out, 8 * c_in).astype(jnp.bfloat16)

    # ---- static valid-position mask over a tile's flat index (same for every tile) ----
    j = jnp.arange(st_pad)
    valid = (j // hw1 < d_tile) & ((j // w1) % h1 < ho) & (j % w1 < wo)
    mask = valid.astype(jnp.float32)[None, :]             # (1, St_pad)

    offs = tuple(qd * hw1 + qh * w1 + qw for qd in (0, 1) for qh in (0, 1) for qw in (0, 1))

    # explicit scoped-VMEM limit from the chosen tile sizes (double-buffered I/O + temps)
    est = 2 * (8 * c_in * lt_pad * 2 + c_out * st_pad * 4) + 8 * c_out * 8 * c_in * 2 \
        + 3 * c_out * st_pad * 4 + 8 * c_in * st_pad * 2 + st_pad * 4
    vmem_limit = int(min(64 * 1024 * 1024, max(32 * 1024 * 1024, 4 * est)))

    kernel1 = functools.partial(_conv_stats_kernel, offs=offs, st_pad=st_pad)
    y_flat, stats = pl.pallas_call(
        kernel1,
        out_shape=(jax.ShapeDtypeStruct((n, c_out, n_dt * st_pad), jnp.float32),
                   jax.ShapeDtypeStruct((n, n_dt, c_out, 2), jnp.float32)),
        grid=(n, n_dt),
        in_specs=[
            pl.BlockSpec((None, None, 8, c_in, lt_pad), lambda i, t: (i, t, 0, 0, 0)),
            pl.BlockSpec((8, c_out, 8 * c_in), lambda i, t: (0, 0, 0)),
            pl.BlockSpec((1, st_pad), lambda i, t: (0, 0)),
        ],
        out_specs=(
            pl.BlockSpec((None, c_out, st_pad), lambda i, t: (i, 0, t)),
            pl.BlockSpec((None, None, c_out, 2), lambda i, t: (i, t, 0, 0)),
        ),
        compiler_params=pltpu.CompilerParams(
            dimension_semantics=("parallel", "parallel"),
            vmem_limit_bytes=vmem_limit),
    )(xpt, w_r, mask)

    # ---- finish InstanceNorm stats on the tiny (N, C_out, 2) array in plain JAX ----
    s_valid = do * ho * wo
    tot = jnp.sum(stats, axis=1)                          # (N, C_out, 2)
    mean = tot[..., 0] / s_valid
    var = jnp.maximum(tot[..., 1] / s_valid - mean * mean, 0.0)   # biased var, one pass
    scale = jax.lax.rsqrt(var + EPS)
    if not normalize:
        mean = jnp.zeros_like(mean)
        scale = jnp.ones_like(scale)
    prm = jnp.stack([mean, scale], axis=-1)               # (N, C_out, 2) f32

    out_flat = pl.pallas_call(
        _norm_act_kernel,
        out_shape=jax.ShapeDtypeStruct((n, c_out, n_dt * st_pad), x.dtype),
        grid=(n, n_dt),
        in_specs=[
            pl.BlockSpec((None, c_out, st_pad), lambda i, t: (i, 0, t)),
            pl.BlockSpec((None, c_out, 2), lambda i, t: (i, 0, 0)),
        ],
        out_specs=pl.BlockSpec((None, c_out, st_pad), lambda i, t: (i, 0, t)),
        compiler_params=pltpu.CompilerParams(
            dimension_semantics=("parallel", "parallel"),
            vmem_limit_bytes=vmem_limit),
    )(y_flat, prm)

    # (N, C_out, n_dt*St_pad) -> drop lane padding and the parity-grid (+1) rows -> NCDHW (no transpose)
    out = out_flat.reshape(n, c_out, n_dt, st_pad)[:, :, :, :st]
    out = out.reshape(n, c_out, do, h1, w1)[:, :, :, :ho, :wo]
    return out


def _reference(x, weight, normalize=True):
    """Pure-JAX reference matching the PyTorch module (f32, HIGHEST precision)."""
    y = jax.lax.conv_general_dilated(
        x, weight, window_strides=(2, 2, 2), padding=[(1, 1)] * 3,
        dimension_numbers=("NCDHW", "OIDHW", "NCDHW"),
        precision=jax.lax.Precision.HIGHEST,
    )
    if normalize:
        mean = jnp.mean(y, axis=(2, 3, 4), keepdims=True)
        var = jnp.mean((y - mean) ** 2, axis=(2, 3, 4), keepdims=True)
        y = (y - mean) * jax.lax.rsqrt(var + EPS)
    return jnp.where(y >= 0, y, LEAKY_SLOPE * y)


if __name__ == "__main__":
    key = jax.random.PRNGKey(0)
    kx, kw = jax.random.split(key)

    N, C_IN, C_OUT = 2, 4, 8
    D = H = W = 8                                          # conv output spatial 4x4x4

    x = jax.random.normal(kx, (N, C_IN, D, H, W), dtype=jnp.float32)
    # Deterministic Conv3d weight init (Kaiming-uniform-like scale), no bias.
    fan_in = C_IN * 4 * 4 * 4
    bound = 1.0 / (fan_in ** 0.5)
    weight = jax.random.uniform(kw, (C_OUT, C_IN, 4, 4, 4),
                                dtype=jnp.float32, minval=-bound, maxval=bound)

    # d_tile=2 -> two S-tiles per sample, exercising the tiled two-pass InstanceNorm path.
    out = unet_down(x, weight, d_tile=2)
    out = jax.block_until_ready(out)

    ref = _reference(x, weight)
    assert out.shape == (N, C_OUT, D // 2, H // 2, W // 2), out.shape
    err = float(jnp.max(jnp.abs(out - ref)))
    assert err < 2e-2, err                                 # bf16 MXU inputs, f32 accumulation

    print("KERNEL_OK")
</pallas_src>

<mosaic_0001>
module attributes {stable_mosaic.version = 11 : i64} {
  func.func @_conv_stats_kernel(%arg0: i32, %arg1: i32, %arg2: memref<1x1x8x4x256xbf16, #tpu.memory_space<vmem>>, %arg3: memref<8x8x32xbf16, #tpu.memory_space<vmem>>, %arg4: memref<1x128xf32, #tpu.memory_space<vmem>>, %arg5: memref<1x8x128xf32, #tpu.memory_space<vmem>>, %arg6: memref<1x1x8x2xf32, #tpu.memory_space<vmem>>) attributes {dimension_semantics = [#tpu.dimension_semantics<parallel>, #tpu.dimension_semantics<parallel>], iteration_bounds = array<i64: 2, 2>, scalar_prefetch = 0 : i64, scratch_operands = 0 : i64, tpu.core_type = #tpu.core_type<tc>, window_params = [{transform_indices = @transform_0, window_bounds = array<i64: 1, 1, 8, 4, 256>}, {pipeline_mode = #tpu.pipeline_mode<synchronous>, transform_indices = @transform_1, window_bounds = array<i64: 8, 8, 32>}, {pipeline_mode = #tpu.pipeline_mode<synchronous>, transform_indices = @transform_2, window_bounds = array<i64: 1, 128>}, {transform_indices = @transform_3, window_bounds = array<i64: 1, 8, 128>}, {transform_indices = @transform_4, window_bounds = array<i64: 1, 1, 8, 2>}]} {
    %cst = arith.constant 0.000000e+00 : f32
    %0 = vector.broadcast %cst : f32 to vector<8x128xf32>
    %c0 = arith.constant 0 : index
    %c0_0 = arith.constant 0 : index
    %c0_1 = arith.constant 0 : index
    %c0_2 = arith.constant 0 : index
    %c0_3 = arith.constant 0 : index
    %1 = vector.load %arg2[%c0, %c0_0, %c0_1, %c0_2, %c0_3] : memref<1x1x8x4x256xbf16, #tpu.memory_space<vmem>>, vector<1x1x1x4x256xbf16>
    %2 = vector.shape_cast %1 : vector<1x1x1x4x256xbf16> to vector<4x256xbf16>
    %3 = vector.extract_strided_slice %2 {offsets = [0, 0], sizes = [4, 128], strides = [1, 1]} : vector<4x256xbf16> to vector<4x128xbf16>
    %4 = vector.extract_strided_slice %2 {offsets = [0, 1], sizes = [4, 128], strides = [1, 1]} : vector<4x256xbf16> to vector<4x128xbf16>
    %5 = vector.extract_strided_slice %2 {offsets = [0, 5], sizes = [4, 128], strides = [1, 1]} : vector<4x256xbf16> to vector<4x128xbf16>
    %6 = vector.extract_strided_slice %2 {offsets = [0, 6], sizes = [4, 128], strides = [1, 1]} : vector<4x256xbf16> to vector<4x128xbf16>
    %7 = vector.extract_strided_slice %2 {offsets = [0, 25], sizes = [4, 128], strides = [1, 1]} : vector<4x256xbf16> to vector<4x128xbf16>
    %8 = vector.extract_strided_slice %2 {offsets = [0, 26], sizes = [4, 128], strides = [1, 1]} : vector<4x256xbf16> to vector<4x128xbf16>
    %9 = vector.extract_strided_slice %2 {offsets = [0, 30], sizes = [4, 128], strides = [1, 1]} : vector<4x256xbf16> to vector<4x128xbf16>
    %10 = vector.extract_strided_slice %2 {offsets = [0, 31], sizes = [4, 128], strides = [1, 1]} : vector<4x256xbf16> to vector<4x128xbf16>
    %11 = tpu.concatenate %3, %4, %5, %6, %7, %8, %9, %10 in 0 : vector<4x128xbf16>, vector<4x128xbf16>, vector<4x128xbf16>, vector<4x128xbf16>, vector<4x128xbf16>, vector<4x128xbf16>, vector<4x128xbf16>, vector<4x128xbf16> -> vector<32x128xbf16>
    %c0_4 = arith.constant 0 : index
    %c0_5 = arith.constant 0 : index
    %c0_6 = arith.constant 0 : index
    %12 = vector.load %arg3[%c0_4, %c0_5, %c0_6] : memref<8x8x32xbf16, #tpu.memory_space<vmem>>, vector<1x8x32xbf16>
    %13 = vector.shape_cast %12 : vector<1x8x32xbf16> to vector<8x32xbf16>
    %cst_7 = arith.constant dense<0.000000e+00> : vector<8x128xf32>
    %14 = tpu.matmul %13, %11, %cst_7 {dimension_numbers = #tpu.dot_dimension_numbers<[1], [0], [0], [1], [0, 0, 1, 1], [], []>} : vector<8x32xbf16>, vector<32x128xbf16>, vector<8x128xf32> -> vector<8x128xf32>
    %15 = arith.addf %0, %14 : vector<8x128xf32>
    %c0_8 = arith.constant 0 : index
    %c0_9 = arith.constant 0 : index
    %c1 = arith.constant 1 : index
    %c0_10 = arith.constant 0 : index
    %c0_11 = arith.constant 0 : index
    %16 = vector.load %arg2[%c0_8, %c0_9, %c1, %c0_10, %c0_11] : memref<1x1x8x4x256xbf16, #tpu.memory_space<vmem>>, vector<1x1x1x4x256xbf16>
    %17 = vector.shape_cast %16 : vector<1x1x1x4x256xbf16> to vector<4x256xbf16>
    %18 = vector.extract_strided_slice %17 {offsets = [0, 0], sizes = [4, 128], strides = [1, 1]} : vector<4x256xbf16> to vector<4x128xbf16>
    %19 = vector.extract_strided_slice %17 {offsets = [0, 1], sizes = [4, 128], strides = [1, 1]} : vector<4x256xbf16> to vector<4x128xbf16>
    %20 = vector.extract_strided_slice %17 {offsets = [0, 5], sizes = [4, 128], strides = [1, 1]} : vector<4x256xbf16> to vector<4x128xbf16>
    %21 = vector.extract_strided_slice %17 {offsets = [0, 6], sizes = [4, 128], strides = [1, 1]} : vector<4x256xbf16> to vector<4x128xbf16>
    %22 = vector.extract_strided_slice %17 {offsets = [0, 25], sizes = [4, 128], strides = [1, 1]} : vector<4x256xbf16> to vector<4x128xbf16>
    %23 = vector.extract_strided_slice %17 {offsets = [0, 26], sizes = [4, 128], strides = [1, 1]} : vector<4x256xbf16> to vector<4x128xbf16>
    %24 = vector.extract_strided_slice %17 {offsets = [0, 30], sizes = [4, 128], strides = [1, 1]} : vector<4x256xbf16> to vector<4x128xbf16>
    %25 = vector.extract_strided_slice %17 {offsets = [0, 31], sizes = [4, 128], strides = [1, 1]} : vector<4x256xbf16> to vector<4x128xbf16>
    %26 = tpu.concatenate %18, %19, %20, %21, %22, %23, %24, %25 in 0 : vector<4x128xbf16>, vector<4x128xbf16>, vector<4x128xbf16>, vector<4x128xbf16>, vector<4x128xbf16>, vector<4x128xbf16>, vector<4x128xbf16>, vector<4x128xbf16> -> vector<32x128xbf16>
    %c1_12 = arith.constant 1 : index
    %c0_13 = arith.constant 0 : index
    %c0_14 = arith.constant 0 : index
    %27 = vector.load %arg3[%c1_12, %c0_13, %c0_14] : memref<8x8x32xbf16, #tpu.memory_space<vmem>>, vector<1x8x32xbf16>
    %28 = vector.shape_cast %27 : vector<1x8x32xbf16> to vector<8x32xbf16>
    %cst_15 = arith.constant dense<0.000000e+00> : vector<8x128xf32>
    %29 = tpu.matmul %28, %26, %cst_15 {dimension_numbers = #tpu.dot_dimension_numbers<[1], [0], [0], [1], [0, 0, 1, 1], [], []>} : vector<8x32xbf16>, vector<32x128xbf16>, vector<8x128xf32> -> vector<8x128xf32>
    %30 = arith.addf %15, %29 : vector<8x128xf32>
    %c0_16 = arith.constant 0 : index
    %c0_17 = arith.constant 0 : index
    %c2 = arith.constant 2 : index
    %c0_18 = arith.constant 0 : index
    %c0_19 = arith.constant 0 : index
    %31 = vector.load %arg2[%c0_16, %c0_17, %c2, %c0_18, %c0_19] : memref<1x1x8x4x256xbf16, #tpu.memory_space<vmem>>, vector<1x1x1x4x256xbf16>
    %32 = vector.shape_cast %31 : vector<1x1x1x4x256xbf16> to vector<4x256xbf16>
    %33 = vector.extract_strided_slice %32 {offsets = [0, 0], sizes = [4, 128], strides = [1, 1]} : vector<4x256xbf16> to vector<4x128xbf16>
    %34 = vector.extract_strided_slice %32 {offsets = [0, 1], sizes = [4, 128], strides = [1, 1]} : vector<4x256xbf16> to vector<4x128xbf16>
    %35 = vector.extract_strided_slice %32 {offsets = [0, 5], sizes = [4, 128], strides = [1, 1]} : vector<4x256xbf16> to vector<4x128xbf16>
    %36 = vector.extract_strided_slice %32 {offsets = [0, 6], sizes = [4, 128], strides = [1, 1]} : vector<4x256xbf16> to vector<4x128xbf16>
    %37 = vector.extract_strided_slice %32 {offsets = [0, 25], sizes = [4, 128], strides = [1, 1]} : vector<4x256xbf16> to vector<4x128xbf16>
    %38 = vector.extract_strided_slice %32 {offsets = [0, 26], sizes = [4, 128], strides = [1, 1]} : vector<4x256xbf16> to vector<4x128xbf16>
    %39 = vector.extract_strided_slice %32 {offsets = [0, 30], sizes = [4, 128], strides = [1, 1]} : vector<4x256xbf16> to vector<4x128xbf16>
    %40 = vector.extract_strided_slice %32 {offsets = [0, 31], sizes = [4, 128], strides = [1, 1]} : vector<4x256xbf16> to vector<4x128xbf16>
    %41 = tpu.concatenate %33, %34, %35, %36, %37, %38, %39, %40 in 0 : vector<4x128xbf16>, vector<4x128xbf16>, vector<4x128xbf16>, vector<4x128xbf16>, vector<4x128xbf16>, vector<4x128xbf16>, vector<4x128xbf16>, vector<4x128xbf16> -> vector<32x128xbf16>
    %c2_20 = arith.constant 2 : index
    %c0_21 = arith.constant 0 : index
    %c0_22 = arith.constant 0 : index
    %42 = vector.load %arg3[%c2_20, %c0_21, %c0_22] : memref<8x8x32xbf16, #tpu.memory_space<vmem>>, vector<1x8x32xbf16>
    %43 = vector.shape_cast %42 : vector<1x8x32xbf16> to vector<8x32xbf16>
    %cst_23 = arith.constant dense<0.000000e+00> : vector<8x128xf32>
    %44 = tpu.matmul %43, %41, %cst_23 {dimension_numbers = #tpu.dot_dimension_numbers<[1], [0], [0], [1], [0, 0, 1, 1], [], []>} : vector<8x32xbf16>, vector<32x128xbf16>, vector<8x128xf32> -> vector<8x128xf32>
    %45 = arith.addf %30, %44 : vector<8x128xf32>
    %c0_24 = arith.constant 0 : index
    %c0_25 = arith.constant 0 : index
    %c3 = arith.constant 3 : index
    %c0_26 = arith.constant 0 : index
    %c0_27 = arith.constant 0 : index
    %46 = vector.load %arg2[%c0_24, %c0_25, %c3, %c0_26, %c0_27] : memref<1x1x8x4x256xbf16, #tpu.memory_space<vmem>>, vector<1x1x1x4x256xbf16>
    %47 = vector.shape_cast %46 : vector<1x1x1x4x256xbf16> to vector<4x256xbf16>
    %48 = vector.extract_strided_slice %47 {offsets = [0, 0], sizes = [4, 128], strides = [1, 1]} : vector<4x256xbf16> to vector<4x128xbf16>
    %49 = vector.extract_strided_slice %47 {offsets = [0, 1], sizes = [4, 128], strides = [1, 1]} : vector<4x256xbf16> to vector<4x128xbf16>
    %50 = vector.extract_strided_slice %47 {offsets = [0, 5], sizes = [4, 128], strides = [1, 1]} : vector<4x256xbf16> to vector<4x128xbf16>
    %51 = vector.extract_strided_slice %47 {offsets = [0, 6], sizes = [4, 128], strides = [1, 1]} : vector<4x256xbf16> to vector<4x128xbf16>
    %52 = vector.extract_strided_slice %47 {offsets = [0, 25], sizes = [4, 128], strides = [1, 1]} : vector<4x256xbf16> to vector<4x128xbf16>
    %53 = vector.extract_strided_slice %47 {offsets = [0, 26], sizes = [4, 128], strides = [1, 1]} : vector<4x256xbf16> to vector<4x128xbf16>
    %54 = vector.extract_strided_slice %47 {offsets = [0, 30], sizes = [4, 128], strides = [1, 1]} : vector<4x256xbf16> to vector<4x128xbf16>
    %55 = vector.extract_strided_slice %47 {offsets = [0, 31], sizes = [4, 128], strides = [1, 1]} : vector<4x256xbf16> to vector<4x128xbf16>
    %56 = tpu.concatenate %48, %49, %50, %51, %52, %53, %54, %55 in 0 : vector<4x128xbf16>, vector<4x128xbf16>, vector<4x128xbf16>, vector<4x128xbf16>, vector<4x128xbf16>, vector<4x128xbf16>, vector<4x128xbf16>, vector<4x128xbf16> -> vector<32x128xbf16>
    %c3_28 = arith.constant 3 : index
    %c0_29 = arith.constant 0 : index
    %c0_30 = arith.constant 0 : index
    %57 = vector.load %arg3[%c3_28, %c0_29, %c0_30] : memref<8x8x32xbf16, #tpu.memory_space<vmem>>, vector<1x8x32xbf16>
    %58 = vector.shape_cast %57 : vector<1x8x32xbf16> to vector<8x32xbf16>
    %cst_31 = arith.constant dense<0.000000e+00> : vector<8x128xf32>
    %59 = tpu.matmul %58, %56, %cst_31 {dimension_numbers = #tpu.dot_dimension_numbers<[1], [0], [0], [1], [0, 0, 1, 1], [], []>} : vector<8x32xbf16>, vector<32x128xbf16>, vector<8x128xf32> -> vector<8x128xf32>
    %60 = arith.addf %45, %59 : vector<8x128xf32>
    %c0_32 = arith.constant 0 : index
    %c0_33 = arith.constant 0 : index
    %c4 = arith.constant 4 : index
    %c0_34 = arith.constant 0 : index
    %c0_35 = arith.constant 0 : index
    %61 = vector.load %arg2[%c0_32, %c0_33, %c4, %c0_34, %c0_35] : memref<1x1x8x4x256xbf16, #tpu.memory_space<vmem>>, vector<1x1x1x4x256xbf16>
    %62 = vector.shape_cast %61 : vector<1x1x1x4x256xbf16> to vector<4x256xbf16>
    %63 = vector.extract_strided_slice %62 {offsets = [0, 0], sizes = [4, 128], strides = [1, 1]} : vector<4x256xbf16> to vector<4x128xbf16>
    %64 = vector.extract_strided_slice %62 {offsets = [0, 1], sizes = [4, 128], strides = [1, 1]} : vector<4x256xbf16> to vector<4x128xbf16>
    %65 = vector.extract_strided_slice %62 {offsets = [0, 5], sizes = [4, 128], strides = [1, 1]} : vector<4x256xbf16> to vector<4x128xbf16>
    %66 = vector.extract_strided_slice %62 {offsets = [0, 6], sizes = [4, 128], strides = [1, 1]} : vector<4x256xbf16> to vector<4x128xbf16>
    %67 = vector.extract_strided_slice %62 {offsets = [0, 25], sizes = [4, 128], strides = [1, 1]} : vector<4x256xbf16> to vector<4x128xbf16>
    %68 = vector.extract_strided_slice %62 {offsets = [0, 26], sizes = [4, 128], strides = [1, 1]} : vector<4x256xbf16> to vector<4x128xbf16>
    %69 = vector.extract_strided_slice %62 {offsets = [0, 30], sizes = [4, 128], strides = [1, 1]} : vector<4x256xbf16> to vector<4x128xbf16>
    %70 = vector.extract_strided_slice %62 {offsets = [0, 31], sizes = [4, 128], strides = [1, 1]} : vector<4x256xbf16> to vector<4x128xbf16>
    %71 = tpu.concatenate %63, %64, %65, %66, %67, %68, %69, %70 in 0 : vector<4x128xbf16>, vector<4x128xbf16>, vector<4x128xbf16>, vector<4x128xbf16>, vector<4x128xbf16>, vector<4x128xbf16>, vector<4x128xbf16>, vector<4x128xbf16> -> vector<32x128xbf16>
    %c4_36 = arith.constant 4 : index
    %c0_37 = arith.constant 0 : index
    %c0_38 = arith.constant 0 : index
    %72 = vector.load %arg3[%c4_36, %c0_37, %c0_38] : memref<8x8x32xbf16, #tpu.memory_space<vmem>>, vector<1x8x32xbf16>
    %73 = vector.shape_cast %72 : vector<1x8x32xbf16> to vector<8x32xbf16>
    %cst_39 = arith.constant dense<0.000000e+00> : vector<8x128xf32>
    %74 = tpu.matmul %73, %71, %cst_39 {dimension_numbers = #tpu.dot_dimension_numbers<[1], [0], [0], [1], [0, 0, 1, 1], [], []>} : vector<8x32xbf16>, vector<32x128xbf16>, vector<8x128xf32> -> vector<8x128xf32>
    %75 = arith.addf %60, %74 : vector<8x128xf32>
    %c0_40 = arith.constant 0 : index
    %c0_41 = arith.constant 0 : index
    %c5 = arith.constant 5 : index
    %c0_42 = arith.constant 0 : index
    %c0_43 = arith.constant 0 : index
    %76 = vector.load %arg2[%c0_40, %c0_41, %c5, %c0_42, %c0_43] : memref<1x1x8x4x256xbf16, #tpu.memory_space<vmem>>, vector<1x1x1x4x256xbf16>
    %77 = vector.shape_cast %76 : vector<1x1x1x4x256xbf16> to vector<4x256xbf16>
    %78 = vector.extract_strided_slice %77 {offsets = [0, 0], sizes = [4, 128], strides = [1, 1]} : vector<4x256xbf16> to vector<4x128xbf16>
    %79 = vector.extract_strided_slice %77 {offsets = [0, 1], sizes = [4, 128], strides = [1, 1]} : vector<4x256xbf16> to vector<4x128xbf16>
    %80 = vector.extract_strided_slice %77 {offsets = [0, 5], sizes = [4, 128], strides = [1, 1]} : vector<4x256xbf16> to vector<4x128xbf16>
    %81 = vector.extract_strided_slice %77 {offsets = [0, 6], sizes = [4, 128], strides = [1, 1]} : vector<4x256xbf16> to vector<4x128xbf16>
    %82 = vector.extract_strided_slice %77 {offsets = [0, 25], sizes = [4, 128], strides = [1, 1]} : vector<4x256xbf16> to vector<4x128xbf16>
    %83 = vector.extract_strided_slice %77 {offsets = [0, 26], sizes = [4, 128], strides = [1, 1]} : vector<4x256xbf16> to vector<4x128xbf16>
    %84 = vector.extract_strided_slice %77 {offsets = [0, 30], sizes = [4, 128], strides = [1, 1]} : vector<4x256xbf16> to vector<4x128xbf16>
    %85 = vector.extract_strided_slice %77 {offsets = [0, 31], sizes = [4, 128], strides = [1, 1]} : vector<4x256xbf16> to vector<4x128xbf16>
    %86 = tpu.concatenate %78, %79, %80, %81, %82, %83, %84, %85 in 0 : vector<4x128xbf16>, vector<4x128xbf16>, vector<4x128xbf16>, vector<4x128xbf16>, vector<4x128xbf16>, vector<4x128xbf16>, vector<4x128xbf16>, vector<4x128xbf16> -> vector<32x128xbf16>
    %c5_44 = arith.constant 5 : index
    %c0_45 = arith.constant 0 : index
    %c0_46 = arith.constant 0 : index
    %87 = vector.load %arg3[%c5_44, %c0_45, %c0_46] : memref<8x8x32xbf16, #tpu.memory_space<vmem>>, vector<1x8x32xbf16>
    %88 = vector.shape_cast %87 : vector<1x8x32xbf16> to vector<8x32xbf16>
    %cst_47 = arith.constant dense<0.000000e+00> : vector<8x128xf32>
    %89 = tpu.matmul %88, %86, %cst_47 {dimension_numbers = #tpu.dot_dimension_numbers<[1], [0], [0], [1], [0, 0, 1, 1], [], []>} : vector<8x32xbf16>, vector<32x128xbf16>, vector<8x128xf32> -> vector<8x128xf32>
    %90 = arith.addf %75, %89 : vector<8x128xf32>
    %c0_48 = arith.constant 0 : index
    %c0_49 = arith.constant 0 : index
    %c6 = arith.constant 6 : index
    %c0_50 = arith.constant 0 : index
    %c0_51 = arith.constant 0 : index
    %91 = vector.load %arg2[%c0_48, %c0_49, %c6, %c0_50, %c0_51] : memref<1x1x8x4x256xbf16, #tpu.memory_space<vmem>>, vector<1x1x1x4x256xbf16>
    %92 = vector.shape_cast %91 : vector<1x1x1x4x256xbf16> to vector<4x256xbf16>
    %93 = vector.extract_strided_slice %92 {offsets = [0, 0], sizes = [4, 128], strides = [1, 1]} : vector<4x256xbf16> to vector<4x128xbf16>
    %94 = vector.extract_strided_slice %92 {offsets = [0, 1], sizes = [4, 128], strides = [1, 1]} : vector<4x256xbf16> to vector<4x128xbf16>
    %95 = vector.extract_strided_slice %92 {offsets = [0, 5], sizes = [4, 128], strides = [1, 1]} : vector<4x256xbf16> to vector<4x128xbf16>
    %96 = vector.extract_strided_slice %92 {offsets = [0, 6], sizes = [4, 128], strides = [1, 1]} : vector<4x256xbf16> to vector<4x128xbf16>
    %97 = vector.extract_strided_slice %92 {offsets = [0, 25], sizes = [4, 128], strides = [1, 1]} : vector<4x256xbf16> to vector<4x128xbf16>
    %98 = vector.extract_strided_slice %92 {offsets = [0, 26], sizes = [4, 128], strides = [1, 1]} : vector<4x256xbf16> to vector<4x128xbf16>
    %99 = vector.extract_strided_slice %92 {offsets = [0, 30], sizes = [4, 128], strides = [1, 1]} : vector<4x256xbf16> to vector<4x128xbf16>
    %100 = vector.extract_strided_slice %92 {offsets = [0, 31], sizes = [4, 128], strides = [1, 1]} : vector<4x256xbf16> to vector<4x128xbf16>
    %101 = tpu.concatenate %93, %94, %95, %96, %97, %98, %99, %100 in 0 : vector<4x128xbf16>, vector<4x128xbf16>, vector<4x128xbf16>, vector<4x128xbf16>, vector<4x128xbf16>, vector<4x128xbf16>, vector<4x128xbf16>, vector<4x128xbf16> -> vector<32x128xbf16>
    %c6_52 = arith.constant 6 : index
    %c0_53 = arith.constant 0 : index
    %c0_54 = arith.constant 0 : index
    %102 = vector.load %arg3[%c6_52, %c0_53, %c0_54] : memref<8x8x32xbf16, #tpu.memory_space<vmem>>, vector<1x8x32xbf16>
    %103 = vector.shape_cast %102 : vector<1x8x32xbf16> to vector<8x32xbf16>
    %cst_55 = arith.constant dense<0.000000e+00> : vector<8x128xf32>
    %104 = tpu.matmul %103, %101, %cst_55 {dimension_numbers = #tpu.dot_dimension_numbers<[1], [0], [0], [1], [0, 0, 1, 1], [], []>} : vector<8x32xbf16>, vector<32x128xbf16>, vector<8x128xf32> -> vector<8x128xf32>
    %105 = arith.addf %90, %104 : vector<8x128xf32>
    %c0_56 = arith.constant 0 : index
    %c0_57 = arith.constant 0 : index
    %c7 = arith.constant 7 : index
    %c0_58 = arith.constant 0 : index
    %c0_59 = arith.constant 0 : index
    %106 = vector.load %arg2[%c0_56, %c0_57, %c7, %c0_58, %c0_59] : memref<1x1x8x4x256xbf16, #tpu.memory_space<vmem>>, vector<1x1x1x4x256xbf16>
    %107 = vector.shape_cast %106 : vector<1x1x1x4x256xbf16> to vector<4x256xbf16>
    %108 = vector.extract_strided_slice %107 {offsets = [0, 0], sizes = [4, 128], strides = [1, 1]} : vector<4x256xbf16> to vector<4x128xbf16>
    %109 = vector.extract_strided_slice %107 {offsets = [0, 1], sizes = [4, 128], strides = [1, 1]} : vector<4x256xbf16> to vector<4x128xbf16>
    %110 = vector.extract_strided_slice %107 {offsets = [0, 5], sizes = [4, 128], strides = [1, 1]} : vector<4x256xbf16> to vector<4x128xbf16>
    %111 = vector.extract_strided_slice %107 {offsets = [0, 6], sizes = [4, 128], strides = [1, 1]} : vector<4x256xbf16> to vector<4x128xbf16>
    %112 = vector.extract_strided_slice %107 {offsets = [0, 25], sizes = [4, 128], strides = [1, 1]} : vector<4x256xbf16> to vector<4x128xbf16>
    %113 = vector.extract_strided_slice %107 {offsets = [0, 26], sizes = [4, 128], strides = [1, 1]} : vector<4x256xbf16> to vector<4x128xbf16>
    %114 = vector.extract_strided_slice %107 {offsets = [0, 30], sizes = [4, 128], strides = [1, 1]} : vector<4x256xbf16> to vector<4x128xbf16>
    %115 = vector.extract_strided_slice %107 {offsets = [0, 31], sizes = [4, 128], strides = [1, 1]} : vector<4x256xbf16> to vector<4x128xbf16>
    %116 = tpu.concatenate %108, %109, %110, %111, %112, %113, %114, %115 in 0 : vector<4x128xbf16>, vector<4x128xbf16>, vector<4x128xbf16>, vector<4x128xbf16>, vector<4x128xbf16>, vector<4x128xbf16>, vector<4x128xbf16>, vector<4x128xbf16> -> vector<32x128xbf16>
    %c7_60 = arith.constant 7 : index
    %c0_61 = arith.constant 0 : index
    %c0_62 = arith.constant 0 : index
    %117 = vector.load %arg3[%c7_60, %c0_61, %c0_62] : memref<8x8x32xbf16, #tpu.memory_space<vmem>>, vector<1x8x32xbf16>
    %118 = vector.shape_cast %117 : vector<1x8x32xbf16> to vector<8x32xbf16>
    %cst_63 = arith.constant dense<0.000000e+00> : vector<8x128xf32>
    %119 = tpu.matmul %118, %116, %cst_63 {dimension_numbers = #tpu.dot_dimension_numbers<[1], [0], [0], [1], [0, 0, 1, 1], [], []>} : vector<8x32xbf16>, vector<32x128xbf16>, vector<8x128xf32> -> vector<8x128xf32>
    %120 = arith.addf %105, %119 : vector<8x128xf32>
    %c0_64 = arith.constant 0 : index
    %c0_65 = arith.constant 0 : index
    %121 = vector.load %arg4[%c0_64, %c0_65] : memref<1x128xf32, #tpu.memory_space<vmem>>, vector<1x128xf32>
    %122 = vector.broadcast %121 : vector<1x128xf32> to vector<8x128xf32>
    %123 = arith.mulf %120, %122 : vector<8x128xf32>
    %cst_66 = arith.constant dense<0.000000e+00> : vector<8xf32>
    %124 = vector.multi_reduction <add>, %123, %cst_66 [1] : vector<8x128xf32> to vector<8xf32>
    %125 = vector.shape_cast %124 : vector<8xf32> to vector<8x1xf32>
    %126 = arith.mulf %123, %120 : vector<8x128xf32>
    %cst_67 = arith.constant dense<0.000000e+00> : vector<8xf32>
    %127 = vector.multi_reduction <add>, %126, %cst_67 [1] : vector<8x128xf32> to vector<8xf32>
    %128 = vector.shape_cast %127 : vector<8xf32> to vector<8x1xf32>
    %c0_68 = arith.constant 0 : index
    %c0_69 = arith.constant 0 : index
    %c0_70 = arith.constant 0 : index
    %129 = vector.load %arg5[%c0_68, %c0_69, %c0_70] : memref<1x8x128xf32, #tpu.memory_space<vmem>>, vector<1x8x128xf32>
    %130 = vector.shape_cast %129 : vector<1x8x128xf32> to vector<8x128xf32>
    %131 = vector.shape_cast %120 : vector<8x128xf32> to vector<1x8x128xf32>
    tpu.vector_store %arg5[%c0_68, %c0_69, %c0_70], %131 {strides = array<i32>} : memref<1x8x128xf32, #tpu.memory_space<vmem>>, vector<1x8x128xf32>,
    %132 = tpu.concatenate %125, %128 in 1 : vector<8x1xf32>, vector<8x1xf32> -> vector<8x2xf32>
    %c0_71 = arith.constant 0 : index
    %c0_72 = arith.constant 0 : index
    %c0_73 = arith.constant 0 : index
    %c0_74 = arith.constant 0 : index
    %133 = vector.load %arg6[%c0_71, %c0_72, %c0_73, %c0_74] : memref<1x1x8x2xf32, #tpu.memory_space<vmem>>, vector<1x1x8x2xf32>
    %134 = vector.shape_cast %133 : vector<1x1x8x2xf32> to vector<8x2xf32>
    %135 = vector.shape_cast %132 : vector<8x2xf32> to vector<1x1x8x2xf32>
    tpu.vector_store %arg6[%c0_71, %c0_72, %c0_73, %c0_74], %135 {strides = array<i32>} : memref<1x1x8x2xf32, #tpu.memory_space<vmem>>, vector<1x1x8x2xf32>,
    return
  }
  func.func @transform_0(%arg0: i32, %arg1: i32) -> (i32, i32, i32, i32, i32) {
    %c0_i32 = arith.constant 0 : i32
    %c0_i32_0 = arith.constant 0 : i32
    %c0_i32_1 = arith.constant 0 : i32
    %c0_i32_2 = arith.constant 0 : i32
    return %arg0, %arg1, %c0_i32, %c0_i32_0, %c0_i32_1 : i32, i32, i32, i32, i32
  }
  func.func @transform_1(%arg0: i32, %arg1: i32) -> (i32, i32, i32) {
    %c0_i32 = arith.constant 0 : i32
    %c0_i32_0 = arith.constant 0 : i32
    %c0_i32_1 = arith.constant 0 : i32
    %c0_i32_2 = arith.constant 0 : i32
    return %c0_i32, %c0_i32_0, %c0_i32_1 : i32, i32, i32
  }
  func.func @transform_2(%arg0: i32, %arg1: i32) -> (i32, i32) {
    %c0_i32 = arith.constant 0 : i32
    %c0_i32_0 = arith.constant 0 : i32
    %c0_i32_1 = arith.constant 0 : i32
    return %c0_i32, %c0_i32_0 : i32, i32
  }
  func.func @transform_3(%arg0: i32, %arg1: i32) -> (i32, i32, i32) {
    %c0_i32 = arith.constant 0 : i32
    %c0_i32_0 = arith.constant 0 : i32
    return %arg0, %c0_i32, %arg1 : i32, i32, i32
  }
  func.func @transform_4(%arg0: i32, %arg1: i32) -> (i32, i32, i32, i32) {
    %c0_i32 = arith.constant 0 : i32
    %c0_i32_0 = arith.constant 0 : i32
    %c0_i32_1 = arith.constant 0 : i32
    return %arg0, %arg1, %c0_i32, %c0_i32_0 : i32, i32, i32, i32
  }
}

</mosaic_0001>

<llo_original>
// kernel: tpu_custom_call.1
$region0: #{tpu_custom_call.1}
  #allocation0 [shape = 'u32[]', space=smem, size = 0x4, offset = 0x4, fixed_abs, tag = 'smem constant byte address 0x4 - core index']
  #allocation1 [shape = 'u32[144,128]{1,0:T(1,128)}', space=vmem, size = 0x12000, scoped, tag = 'internal scratch']
  %s0 = inlined_call_operand.hbm [shape: bf16[2,2,8,4,256], index: 0, kind: input, shape index: {}]
  %s1 = inlined_call_operand.hbm [shape: bf16[8,8,32], index: 1, kind: input, shape index: {}]
  %s2 = inlined_call_operand.vmem [shape: f32[1,128], index: 2, kind: input, shape index: {}]
  %s3 = inlined_call_operand.hbm [shape: f32[2,8,256], index: 3, kind: output, shape index: {0}]
  %s4 = inlined_call_operand.vmem [shape: f32[2,2,8,2], index: 4, kind: output, shape index: {1}]
  %5 = xla_tuple %s3, %s4
  %s6 = sld [smem:[#allocation0]]
  $region61: #{tpu_custom_call.1} parent=0
    _
  %s8 = ssub.s32 1, %s6
  %s9 = scalar_select 0, %s8, %s6
  $region1: #{tpu_custom_call.1} parent=0
    #allocation2 [shape = 'u8[32768]{0}', space=vmem, size = 0x8000, scoped, tag = 'input window, operand 0']
    #allocation3 [shape = 's32[2]{0}', space=sflag, size = 0x8, scoped, tag = 'scoped memory for tpu_custom_call.1']
    #allocation4 [shape = 's32[2]{0}', space=sflag, size = 0x8, scoped, tag = 'scoped memory for tpu_custom_call.1']
    #allocation5 [shape = 'u8[16384]{0}', space=vmem, size = 0x4000, scoped, tag = 'input window, operand 1, single buffered']
    #allocation6 [shape = 's32[1]{0}', space=sflag, size = 0x4, scoped, tag = 'scoped memory for tpu_custom_call.1']
    #allocation7 [shape = 'u8[8192]{0}', space=vmem, size = 0x2000, scoped, tag = 'output window, operand 0']
    %10 = vsyncpa [#allocation3], 0
    %s11 = scalar_lea.sflag [#allocation3], 1
    %12 = vsyncpa %s11, 0
    %13 = vsyncpa [#allocation6], 0
    %14 = vsyncpa [#allocation4], 0
    %s15 = scalar_lea.sflag [#allocation4], 1
    %16 = vsyncpa %s15, 0
    loop: start=0, step=1, limit=6
    $region2: #{tpu_custom_call.1} parent=1 // loop_pre_header
      _
    $region3: #{tpu_custom_call.1} parent=1 // loop_header
      %s18 = sphi 0, %s22
      %p19 = scmp.ge.s32.totalorder %s18, 6
      %s25 = sphi 0, %s37
      %s26 = sphi 0, %s33
      %s27 = sphi 0, %s25
      %s28 = sphi 0, %s26
      %s29 = sphi 0, %s27
      %s30 = sphi 0, %s28
      %s42 = sphi 0, %s44
      %s45 = sphi 0, %s42
      %s46 = sphi 0, %s45
      %s62 = sphi 0, %s46
      %s66 = sphi 0, %s66
      %s68 = sphi 0, %s66
      %s69 = sphi 0, %s68
      %s83 = sphi 0, %s69
      %s87 = sphi 0, %s87
      %s89 = sphi 0, %s87
      %s90 = sphi 0, %s89
      %s104 = sphi 0, %s90
      %s112 = sphi 0, %s114
      %s115 = sphi 0, %s112
      %s116 = sphi 0, %s115
      %s132 = sphi 0, %s116
      %s140 = sphi 0, %s142
      %s143 = sphi 0, %s140
      %s144 = sphi 0, %s143
      %s160 = sphi 0, %s144
    $region4: #{tpu_custom_call.1} parent=1 // loop_header_branch
      %21 = sbr.rel (%p19) target = $region8
    $region5: #{tpu_custom_call.1} parent=1 // loop_body
      %s23 = ssub.s32 %s18, 1
      %s24 = ssub.s32 %s18, 2
      %s31 = sadd.s32 1, %s26
      %p32 = scmp.ge.s32.totalorder %s31, 2
      %s33 = scalar_select %p32, 0, %s31
      %s34 = sadd.s32 1, %s25
      %s35 = scalar_select %p32, %s34, %s25
      %p36 = scmp.ge.s32.totalorder %s35, 2
      %s37 = scalar_select %p36, 0, %s35
      %s38 = ssub.s32 %s25, %s37
      %s39 = ssub.s32 %s26, %s33
      %s40 = sor.u32 %s38, %s39
      %p41 = scmp.eq.s32.totalorder %s40, 0
      %s43 = sadd.s32 %s42, 1
      %s44 = scalar_select %p41, %s42, %s43
      %p47 = pneg %p41
      %p48 = scmp.eq.s32.totalorder %s18, 3
      %p49 = por %p47, %p48
      %p50 = scmp.ne.s32.totalorder %s42, %s45
      %p51 = scmp.eq.s32.totalorder %s18, 0
      %p52 = por %p50, %p51
      %p53 = scmp.ne.s32.totalorder %s42, %s45
      %p54 = scmp.eq.s32.totalorder %s23, 3
      %p55 = por %p53, %p54
      %p56 = scmp.ne.s32.totalorder %s45, %s46
      %p57 = scmp.eq.s32.totalorder %s23, 0
      %p58 = por %p56, %p57
      %p59 = scmp.ne.s32.totalorder %s45, %s46
      %p60 = scmp.eq.s32.totalorder %s24, 3
      %p61 = por %p59, %p60
      %p63 = scmp.ne.s32.totalorder %s46, %s62
      %p64 = scmp.eq.s32.totalorder %s24, 0
      %p65 = por %p63, %p64
      %s67 = sadd.s32 %s66, 1
      %p70 = scmp.eq.s32.totalorder %s18, 3
      %p71 = scmp.ne.s32.totalorder %s66, %s68
      %p72 = scmp.eq.s32.totalorder %s18, 0
      %p73 = por %p71, %p72
      %p74 = scmp.ne.s32.totalorder %s66, %s68
      %p75 = scmp.eq.s32.totalorder %s23, 3
      %p76 = por %p74, %p75
      %p77 = scmp.ne.s32.totalorder %s68, %s69
      %p78 = scmp.eq.s32.totalorder %s23, 0
      %p79 = por %p77, %p78
      %p80 = scmp.ne.s32.totalorder %s68, %s69
      %p81 = scmp.eq.s32.totalorder %s24, 3
      %p82 = por %p80, %p81
      %p84 = scmp.ne.s32.totalorder %s69, %s83
      %p85 = scmp.eq.s32.totalorder %s24, 0
      %p86 = por %p84, %p85
      %s88 = sadd.s32 %s87, 1
      %p91 = scmp.eq.s32.totalorder %s18, 3
      %p92 = scmp.ne.s32.totalorder %s87, %s89
      %p93 = scmp.eq.s32.totalorder %s18, 0
      %p94 = por %p92, %p93
      %p95 = scmp.ne.s32.totalorder %s87, %s89
      %p96 = scmp.eq.s32.totalorder %s23, 3
      %p97 = por %p95, %p96
      %p98 = scmp.ne.s32.totalorder %s89, %s90
      %p99 = scmp.eq.s32.totalorder %s23, 0
      %p100 = por %p98, %p99
      %p101 = scmp.ne.s32.totalorder %s89, %s90
      %p102 = scmp.eq.s32.totalorder %s24, 3
      %p103 = por %p101, %p102
      %p105 = scmp.ne.s32.totalorder %s90, %s104
      %p106 = scmp.eq.s32.totalorder %s24, 0
      %p107 = por %p105, %p106
      %s108 = ssub.s32 %s25, %s37
      %s109 = ssub.s32 %s26, %s33
      %s110 = sor.u32 %s108, %s109
      %p111 = scmp.eq.s32.totalorder %s110, 0
      %s113 = sadd.s32 %s112, 1
      %s114 = scalar_select %p111, %s112, %s113
      %p117 = pneg %p111
      %p118 = scmp.eq.s32.totalorder %s18, 3
      %p119 = por %p117, %p118
      %p120 = scmp.ne.s32.totalorder %s112, %s115
      %p121 = scmp.eq.s32.totalorder %s18, 0
      %p122 = por %p120, %p121
      %p123 = scmp.ne.s32.totalorder %s112, %s115
      %p124 = scmp.eq.s32.totalorder %s23, 3
      %p125 = por %p123, %p124
      %p126 = scmp.ne.s32.totalorder %s115, %s116
      %p127 = scmp.eq.s32.totalorder %s23, 0
      %p128 = por %p126, %p127
      %p129 = scmp.ne.s32.totalorder %s115, %s116
      %p130 = scmp.eq.s32.totalorder %s24, 3
      %p131 = por %p129, %p130
      %p133 = scmp.ne.s32.totalorder %s116, %s132
      %p134 = scmp.eq.s32.totalorder %s24, 0
      %p135 = por %p133, %p134
      %s136 = ssub.s32 %s25, %s37
      %s137 = ssub.s32 %s26, %s33
      %s138 = sor.u32 %s136, %s137
      %p139 = scmp.eq.s32.totalorder %s138, 0
      %s141 = sadd.s32 %s140, 1
      %s142 = scalar_select %p139, %s140, %s141
      %p145 = pneg %p139
      %p146 = scmp.eq.s32.totalorder %s18, 3
      %p147 = por %p145, %p146
      %p148 = scmp.ne.s32.totalorder %s140, %s143
      %p149 = scmp.eq.s32.totalorder %s18, 0
      %p150 = por %p148, %p149
      %p151 = scmp.ne.s32.totalorder %s140, %s143
      %p152 = scmp.eq.s32.totalorder %s23, 3
      %p153 = por %p151, %p152
      %p154 = scmp.ne.s32.totalorder %s143, %s144
      %p155 = scmp.eq.s32.totalorder %s23, 0
      %p156 = por %p154, %p155
      %p157 = scmp.ne.s32.totalorder %s143, %s144
      %p158 = scmp.eq.s32.totalorder %s24, 3
      %p159 = por %p157, %p158
      %p161 = scmp.ne.s32.totalorder %s144, %s160
      %p162 = scmp.eq.s32.totalorder %s24, 0
      %p163 = por %p161, %p162
      %p164 = scmp.le.s32.totalorder 1, %s18
      %p165 = scmp.lt.s32.totalorder %s18, 5
      %p166 = pnand %p164, %p165
      %p167 = pneg %p166
      // Predicated region
      $region9: #{tpu_custom_call.1} parent=5 // pred_check
        _
      $region10: #{tpu_custom_call.1} parent=5 // pred_check_branch
        %169 = sbr.rel (%p166) target = $region12
      $region11: #{tpu_custom_call.1} parent=5 // pred_region
        %s170 = ssub.s32 %s18, 1
        // Predicated region
        $region13: #{tpu_custom_call.1} parent=11 // pred_check
          %p171 = pneg %p79
        $region14: #{tpu_custom_call.1} parent=11 // pred_check_branch
          %173 = sbr.rel (%p171) target = $region16
        $region15: #{tpu_custom_call.1} parent=11 // pred_region
          %s175 = ssub.s32 512, 512
          %176 = vsyncadd [#allocation6], %s175
          %s177 = sshll.u32 [#allocation5], 4
          %s178 = int_to_ptr.vmem [resolvable:$true] %s177
          %183 = dma.hbm_to_vmem [thread:$0]  %s1, 512, %s178, [#allocation6], 64, 64, 4
        $region16: #{tpu_custom_call.1} parent=11 // pred_fallthru
          _
        // Predicated region
        $region17: #{tpu_custom_call.1} parent=11 // pred_check
          %p184 = pneg %p100
        $region18: #{tpu_custom_call.1} parent=11 // pred_check_branch
          %186 = sbr.rel (%p184) target = $region20
        $region19: #{tpu_custom_call.1} parent=11 // pred_region
          _
        $region20: #{tpu_custom_call.1} parent=11 // pred_fallthru
          _
      $region12: #{tpu_custom_call.1} parent=5 // pred_fallthru
        _
      %p187 = scmp.lt.s32.totalorder %s18, 4
      // Predicated region
      $region21: #{tpu_custom_call.1} parent=5 // pred_check
        %p188 = pneg %p187
      $region22: #{tpu_custom_call.1} parent=5 // pred_check_branch
        %190 = sbr.rel (%p188) target = $region24
      $region23: #{tpu_custom_call.1} parent=5 // pred_region
        // Predicated region
        $region25: #{tpu_custom_call.1} parent=23 // pred_check
          %p191 = pneg %p52
        $region26: #{tpu_custom_call.1} parent=23 // pred_check_branch
          %193 = sbr.rel (%p191) target = $region28
        $region27: #{tpu_custom_call.1} parent=23 // pred_region
          %s194 = sand.u32 %s42, 1
          %s195 = scalar_lea.sflag [#allocation3], %s194
          %s196 = sand.u32 %s42, 1
          %s197 = smul.addr %s196, 32
          %s198 = scalar_lea.vmem [#allocation2], %s197
          %s200 = ssub.s32 512, 512
          %201 = vsyncadd %s195, %s200
          %s202 = smul.addr %s26, 16
          %s203 = smul.addr %s25, 32
          %s204 = sadd.s32 %s202, %s203
          %s205 = smul.addr %s204, 32
          %s206 = scalar_lea.hbm %s0, %s205
          %s207 = sshll.u32 %s198, 4
          %s208 = int_to_ptr.vmem [resolvable:$true] %s207
          %213 = dma.hbm_to_vmem [thread:$0]  %s206, 512, %s208, %s195, 64, 64, 4
        $region28: #{tpu_custom_call.1} parent=23 // pred_fallthru
          _
      $region24: #{tpu_custom_call.1} parent=5 // pred_fallthru
        _
      %p214 = scmp.le.s32.totalorder 1, %s18
      %p215 = scmp.lt.s32.totalorder %s18, 5
      %p216 = pnand %p214, %p215
      %p217 = pneg %p216
      // Predicated region
      $region29: #{tpu_custom_call.1} parent=5 // pred_check
        _
      $region30: #{tpu_custom_call.1} parent=5 // pred_check_branch
        %219 = sbr.rel (%p216) target = $region32
      $region31: #{tpu_custom_call.1} parent=5 // pred_region
        %s220 = ssub.s32 %s18, 1
        %s221 = sand.u32 %s45, 1
        %s222 = scalar_lea.sflag [#allocation3], %s221
        %s223 = sand.u32 %s45, 1
        %s224 = smul.addr %s223, 32
        %s225 = scalar_lea.vmem [#allocation2], %s224
        // Predicated region
        $region33: #{tpu_custom_call.1} parent=31 // pred_check
          %p226 = pneg %p58
        $region34: #{tpu_custom_call.1} parent=31 // pred_check_branch
          %228 = sbr.rel (%p226) target = $region36
        $region35: #{tpu_custom_call.1} parent=31 // pred_region
          %229 = dma.done %s222, 512
        $region36: #{tpu_custom_call.1} parent=31 // pred_fallthru
          _
        // Predicated region
        $region37: #{tpu_custom_call.1} parent=31 // pred_check
          %p230 = pneg %p79
        $region38: #{tpu_custom_call.1} parent=31 // pred_check_branch
          %232 = sbr.rel (%p230) target = $region40
        $region39: #{tpu_custom_call.1} parent=31 // pred_region
          %233 = dma.done [#allocation6], 512
        $region40: #{tpu_custom_call.1} parent=31 // pred_fallthru
          _
        %s234 = sand.u32 %s45, 1
        %s235 = scalar_lea.sflag [#allocation3], %s234
        %s236 = sand.u32 %s45, 1
        %s237 = smul.addr %s236, 32
        %s238 = scalar_lea.vmem [#allocation2], %s237
        %p239 = pneg %p58
        %p240 = pneg %p55
        %p241 = pneg %p79
        %p242 = pneg %p76
        %p243 = pneg %p100
        %p244 = pneg %p97
        %p245 = pneg %p128
        %p246 = pneg %p125
        %s247 = sand.u32 %s115, 1
        %s248 = scalar_lea.sflag [#allocation4], %s247
        %s249 = sand.u32 %s115, 1
        %s250 = smul.addr %s249, 8
        %s251 = scalar_lea.vmem [#allocation7], %s250
        %p252 = pneg %p156
        %p253 = pneg %p153
        %p254 = scmp.lt.s32.totalorder %s27, 1
        %s255 = scalar_select %p254, %s27, 1
        %p256 = scmp.lt.s32.totalorder %s28, 1
        %s257 = scalar_select %p256, %s28, 1
        %s258 = smul.addr %s255, 2
        %s259 = sadd.s32 %s257, %s258
        %s260 = smul.addr %s259, 8
        %s261 = scalar_lea.vmem %s4, %s260
        %p262 = scmp.lt.s32.totalorder %s27, 1
        %s263 = scalar_select %p262, %s27, 1
        %p264 = scmp.lt.s32.totalorder %s28, 1
        %s265 = scalar_select %p264, %s28, 1
        %s266 = smul.addr %s263, 2
        %s267 = sadd.s32 %s265, %s266
        %s268 = smul.addr %s267, 8
        %s269 = scalar_lea.vmem %s4, %s268
        %v271 = vld [vmem:[%s225] sm:$0xf]
        %v273 = vcombine.low %v271, %v271
        %v275 = vunpack.c.l.s4 1983009808
        %v276 = vunpack.c.0.s8 %v275
        %v277 = vlaneseq
        %v278 = vshrl.u32 %v277, 7
        %v279 = vsub.s32 %v276, %v278
        %v280 = vrot.slane %v273, %v279
        %v282 = vunpack.c.l.s4 1983009808
        %v283 = vunpack.c.0.s8 %v282
        %v284 = vlaneseq
        %v285 = vshrl.u32 %v284, 7
        %v286 = vsub.s32 %v283, %v285
        %v287 = vrot.slane %v271, %v286
        %v288 = vcombine.high %v280, %v280
        %289 = vrot.lane.b32.xlu0 %v280, 127
        %v290 = vpop.permute.xlu0 %289
        %291 = vrot.lane.b32.xlu0 %v288, 127
        %v292 = vpop.permute.xlu0 %291
        %vm293 = vcmask 1039360
        %v294 = vsel %vm293, %v290, %v292
        %v295 = vcombine.low %v287, %v287
        %296 = vrot.lane.b32.xlu0 %v295, 123
        %v297 = vpop.permute.xlu0 %296
        %298 = vrot.lane.b32.xlu0 %v287, 123
        %v299 = vpop.permute.xlu0 %298
        %vm300 = vcmask 1006592
        %v301 = vsel %vm300, %v297, %v299
        %v302 = vcombine.low %v280, %v280
        %303 = vrot.lane.b32.xlu0 %v302, 122
        %v304 = vpop.permute.xlu0 %303
        %305 = vrot.lane.b32.xlu0 %v280, 122
        %v306 = vpop.permute.xlu0 %305
        %vm307 = vcmask 998400
        %v308 = vsel %vm307, %v304, %v306
        %v309 = vcombine.high %v287, %v287
        %310 = vrot.lane.b32.xlu0 %v287, 103
        %v311 = vpop.permute.xlu0 %310
        %312 = vrot.lane.b32.xlu0 %v309, 103
        %v313 = vpop.permute.xlu0 %312
        %vm314 = vcmask 842752
        %v315 = vsel %vm314, %v311, %v313
        %316 = vrot.lane.b32.xlu0 %v280, 102
        %v317 = vpop.permute.xlu0 %316
        %318 = vrot.lane.b32.xlu0 %v288, 102
        %v319 = vpop.permute.xlu0 %318
        %vm320 = vcmask 834560
        %v321 = vsel %vm320, %v317, %v319
        %322 = vrot.lane.b32.xlu0 %v295, 98
        %v323 = vpop.permute.xlu0 %322
        %324 = vrot.lane.b32.xlu0 %v287, 98
        %v325 = vpop.permute.xlu0 %324
        %vm326 = vcmask 801792
        %v327 = vsel %vm326, %v323, %v325
        %328 = vrot.lane.b32.xlu0 %v302, 97
        %v329 = vpop.permute.xlu0 %328
        %330 = vrot.lane.b32.xlu0 %v280, 97
        %v331 = vpop.permute.xlu0 %330
        %vm332 = vcmask 793600
        %v333 = vsel %vm332, %v329, %v331
        %vm334 = vcmask 1041408
        %v337 = vsel %vm334, %v271, %v294
        %vm338 = vcmask 1043456
        %v340 = vsel %vm338, %v337, %v301
        %vm341 = vcmask 1045504
        %v343 = vsel %vm341, %v340, %v308
        %v347 = vsel %vm334, %v315, %v321
        %v349 = vsel %vm338, %v347, %v327
        %v351 = vsel %vm341, %v349, %v333
        %v353 = vld [vmem:[#allocation5] sm:$0xf]
        %s354 = scalar_lea.vmem %s225, 4 [#allocation2]
        %v355 = vld [vmem:[%s354] sm:$0xf]
        %v357 = vcombine.low %v355, %v355
        %v359 = vunpack.c.l.s4 1983009808
        %v360 = vunpack.c.0.s8 %v359
        %v361 = vlaneseq
        %v362 = vshrl.u32 %v361, 7
        %v363 = vsub.s32 %v360, %v362
        %v364 = vrot.slane %v357, %v363
        %v366 = vunpack.c.l.s4 1983009808
        %v367 = vunpack.c.0.s8 %v366
        %v368 = vlaneseq
        %v369 = vshrl.u32 %v368, 7
        %v370 = vsub.s32 %v367, %v369
        %v371 = vrot.slane %v355, %v370
        %v372 = vcombine.high %v364, %v364
        %373 = vrot.lane.b32.xlu0 %v364, 127
        %v374 = vpop.permute.xlu0 %373
        %375 = vrot.lane.b32.xlu0 %v372, 127
        %v376 = vpop.permute.xlu0 %375
        %v377 = vsel %vm293, %v374, %v376
        %v378 = vcombine.low %v371, %v371
        %379 = vrot.lane.b32.xlu0 %v378, 123
        %v380 = vpop.permute.xlu0 %379
        %381 = vrot.lane.b32.xlu0 %v371, 123
        %v382 = vpop.permute.xlu0 %381
        %v383 = vsel %vm300, %v380, %v382
        %v384 = vcombine.low %v364, %v364
        %385 = vrot.lane.b32.xlu0 %v384, 122
        %v386 = vpop.permute.xlu0 %385
        %387 = vrot.lane.b32.xlu0 %v364, 122
        %v388 = vpop.permute.xlu0 %387
        %v389 = vsel %vm307, %v386, %v388
        %v390 = vcombine.high %v371, %v371
        %391 = vrot.lane.b32.xlu0 %v371, 103
        %v392 = vpop.permute.xlu0 %391
        %393 = vrot.lane.b32.xlu0 %v390, 103
        %v394 = vpop.permute.xlu0 %393
        %v395 = vsel %vm314, %v392, %v394
        %396 = vrot.lane.b32.xlu0 %v364, 102
        %v397 = vpop.permute.xlu0 %396
        %398 = vrot.lane.b32.xlu0 %v372, 102
        %v399 = vpop.permute.xlu0 %398
        %v400 = vsel %vm320, %v397, %v399
        %401 = vrot.lane.b32.xlu0 %v378, 98
        %v402 = vpop.permute.xlu0 %401
        %403 = vrot.lane.b32.xlu0 %v371, 98
        %v404 = vpop.permute.xlu0 %403
        %v405 = vsel %vm326, %v402, %v404
        %406 = vrot.lane.b32.xlu0 %v384, 97
        %v407 = vpop.permute.xlu0 %406
        %408 = vrot.lane.b32.xlu0 %v364, 97
        %v409 = vpop.permute.xlu0 %408
        %v410 = vsel %vm332, %v407, %v409
        %v413 = vsel %vm334, %v355, %v377
        %v415 = vsel %vm338, %v413, %v383
        %v417 = vsel %vm341, %v415, %v389
        %v421 = vsel %vm334, %v395, %v400
        %v423 = vsel %vm338, %v421, %v405
        %v425 = vsel %vm341, %v423, %v410
        %s427 = scalar_lea.vmem [#allocation5], 4
        %v428 = vld [vmem:[%s427] sm:$0xf]
        %vm429 = vcmask 261120
        %v431 = vsel %vm429, %v428, 0
        %433 = vmatprep.subr.bf16.mxu0 0
        %434 = vmatpush1.bf16.msra.mxu0 %v417
        %435 = vmatprep.subr.bf16.mxu0 0
        %436 = vmatpush1.bf16.msra.mxu0 %v425
        %437 = vmatprep.subr.bf16.mxu0 0
        %438 = vmatpush1.bf16.msra.mxu0 0
        %439 = vmatprep.subr.bf16.mxu0 0
        %440 = vmatpush1.bf16.msra.mxu0 0
        %441 = vmatprep.subr.bf16.mxu0 0
        %442 = vmatpush1.bf16.msra.mxu0 0
        %443 = vmatprep.subr.bf16.mxu0 0
        %444 = vmatpush1.bf16.msra.mxu0 0
        %445 = vmatprep.subr.bf16.mxu0 0
        %446 = vmatpush1.bf16.msra.mxu0 0
        %447 = vmatprep.subr.bf16.mxu0 0
        %448 = vmatpush1.bf16.msra.mxu0 0
        %449 = vmatprep.subr.bf16.mxu0 0
        %450 = vmatpush1.bf16.msra.mxu0 0
        %451 = vmatprep.subr.bf16.mxu0 0
        %452 = vmatpush1.bf16.msra.mxu0 0
        %453 = vmatprep.subr.bf16.mxu0 0
        %454 = vmatpush1.bf16.msra.mxu0 0
        %455 = vmatprep.subr.bf16.mxu0 0
        %456 = vmatpush1.bf16.msra.mxu0 0
        %457 = vmatprep.subr.bf16.mxu0 0
        %458 = vmatpush1.bf16.msra.mxu0 0
        %459 = vmatprep.subr.bf16.mxu0 0
        %460 = vmatpush1.bf16.msra.mxu0 0
        %461 = vmatprep.subr.bf16.mxu0 0
        %462 = vmatpush1.bf16.msra.mxu0 0
        %463 = vmatprep.subr.bf16.mxu0 0
        %464 = vmatpush1.bf16.msra.mxu0 0
        %465 = vmatprep.mubr.bf16.mxu0 0
        %466 = vmatmul.mubr.bf16.gmra.mrb[0].mxu0 %v431
        %v467 = vpop.f32.mrb[0].mxu0
        %v468 = vadd.f32 0.0, %v467
        %v469 = vpop.f32.mrb[0].mxu0
        %v470 = vpop.f32.mrb[0].mxu0
        %v471 = vpop.f32.mrb[0].mxu0
        %472 = vdwg.mxu0
        %v474 = vsel %vm429, %v353, 0
        %476 = vmatprep.subr.bf16.mxu0 0
        %477 = vmatpush1.bf16.msra.mxu0 %v343
        %478 = vmatprep.subr.bf16.mxu0 0
        %479 = vmatpush1.bf16.msra.mxu0 %v351
        %480 = vmatprep.subr.bf16.mxu0 0
        %481 = vmatpush1.bf16.msra.mxu0 0
        %482 = vmatprep.subr.bf16.mxu0 0
        %483 = vmatpush1.bf16.msra.mxu0 0
        %484 = vmatprep.subr.bf16.mxu0 0
        %485 = vmatpush1.bf16.msra.mxu0 0
        %486 = vmatprep.subr.bf16.mxu0 0
        %487 = vmatpush1.bf16.msra.mxu0 0
        %488 = vmatprep.subr.bf16.mxu0 0
        %489 = vmatpush1.bf16.msra.mxu0 0
        %490 = vmatprep.subr.bf16.mxu0 0
        %491 = vmatpush1.bf16.msra.mxu0 0
        %492 = vmatprep.subr.bf16.mxu0 0
        %493 = vmatpush1.bf16.msra.mxu0 0
        %494 = vmatprep.subr.bf16.mxu0 0
        %495 = vmatpush1.bf16.msra.mxu0 0
        %496 = vmatprep.subr.bf16.mxu0 0
        %497 = vmatpush1.bf16.msra.mxu0 0
        %498 = vmatprep.subr.bf16.mxu0 0
        %499 = vmatpush1.bf16.msra.mxu0 0
        %500 = vmatprep.subr.bf16.mxu0 0
        %501 = vmatpush1.bf16.msra.mxu0 0
        %502 = vmatprep.subr.bf16.mxu0 0
        %503 = vmatpush1.bf16.msra.mxu0 0
        %504 = vmatprep.subr.bf16.mxu0 0
        %505 = vmatpush1.bf16.msra.mxu0 0
        %506 = vmatprep.subr.bf16.mxu0 0
        %507 = vmatpush1.bf16.msra.mxu0 0
        %508 = vmatprep.mubr.bf16.mxu0 0
        %509 = vmatmul.mubr.bf16.gmra.mrb[0].mxu0 %v474
        %v510 = vpop.f32.mrb[0].mxu0
        %v511 = vadd.f32 %v468, %v510
        %v512 = vpop.f32.mrb[0].mxu0
        %v513 = vpop.f32.mrb[0].mxu0
        %v514 = vpop.f32.mrb[0].mxu0
        %515 = vdwg.mxu0
        %s516 = scalar_lea.vmem %s225, 8 [#allocation2]
        %v517 = vld [vmem:[%s516] sm:$0xf]
        %v519 = vcombine.low %v517, %v517
        %v521 = vunpack.c.l.s4 1983009808
        %v522 = vunpack.c.0.s8 %v521
        %v523 = vlaneseq
        %v524 = vshrl.u32 %v523, 7
        %v525 = vsub.s32 %v522, %v524
        %v526 = vrot.slane %v519, %v525
        %v528 = vunpack.c.l.s4 1983009808
        %v529 = vunpack.c.0.s8 %v528
        %v530 = vlaneseq
        %v531 = vshrl.u32 %v530, 7
        %v532 = vsub.s32 %v529, %v531
        %v533 = vrot.slane %v517, %v532
        %v534 = vcombine.high %v526, %v526
        %535 = vrot.lane.b32.xlu0 %v526, 127
        %v536 = vpop.permute.xlu0 %535
        %537 = vrot.lane.b32.xlu0 %v534, 127
        %v538 = vpop.permute.xlu0 %537
        %v539 = vsel %vm293, %v536, %v538
        %v540 = vcombine.low %v533, %v533
        %541 = vrot.lane.b32.xlu0 %v540, 123
        %v542 = vpop.permute.xlu0 %541
        %543 = vrot.lane.b32.xlu0 %v533, 123
        %v544 = vpop.permute.xlu0 %543
        %v545 = vsel %vm300, %v542, %v544
        %v546 = vcombine.low %v526, %v526
        %547 = vrot.lane.b32.xlu0 %v546, 122
        %v548 = vpop.permute.xlu0 %547
        %549 = vrot.lane.b32.xlu0 %v526, 122
        %v550 = vpop.permute.xlu0 %549
        %v551 = vsel %vm307, %v548, %v550
        %v552 = vcombine.high %v533, %v533
        %553 = vrot.lane.b32.xlu0 %v533, 103
        %v554 = vpop.permute.xlu0 %553
        %555 = vrot.lane.b32.xlu0 %v552, 103
        %v556 = vpop.permute.xlu0 %555
        %v557 = vsel %vm314, %v554, %v556
        %558 = vrot.lane.b32.xlu0 %v526, 102
        %v559 = vpop.permute.xlu0 %558
        %560 = vrot.lane.b32.xlu0 %v534, 102
        %v561 = vpop.permute.xlu0 %560
        %v562 = vsel %vm320, %v559, %v561
        %563 = vrot.lane.b32.xlu0 %v540, 98
        %v564 = vpop.permute.xlu0 %563
        %565 = vrot.lane.b32.xlu0 %v533, 98
        %v566 = vpop.permute.xlu0 %565
        %v567 = vsel %vm326, %v564, %v566
        %568 = vrot.lane.b32.xlu0 %v546, 97
        %v569 = vpop.permute.xlu0 %568
        %570 = vrot.lane.b32.xlu0 %v526, 97
        %v571 = vpop.permute.xlu0 %570
        %v572 = vsel %vm332, %v569, %v571
        %v575 = vsel %vm334, %v517, %v539
        %v577 = vsel %vm338, %v575, %v545
        %v579 = vsel %vm341, %v577, %v551
        %v583 = vsel %vm334, %v557, %v562
        %v585 = vsel %vm338, %v583, %v567
        %v587 = vsel %vm341, %v585, %v572
        %s589 = scalar_lea.vmem [#allocation5], 8
        %v590 = vld [vmem:[%s589] sm:$0xf]
        %v592 = vsel %vm429, %v590, 0
        %594 = vmatprep.subr.bf16.mxu0 0
        %595 = vmatpush1.bf16.msra.mxu0 %v579
        %596 = vmatprep.subr.bf16.mxu0 0
        %597 = vmatpush1.bf16.msra.mxu0 %v587
        %598 = vmatprep.subr.bf16.mxu0 0
        %599 = vmatpush1.bf16.msra.mxu0 0
        %600 = vmatprep.subr.bf16.mxu0 0
        %601 = vmatpush1.bf16.msra.mxu0 0
        %602 = vmatprep.subr.bf16.mxu0 0
        %603 = vmatpush1.bf16.msra.mxu0 0
        %604 = vmatprep.subr.bf16.mxu0 0
        %605 = vmatpush1.bf16.msra.mxu0 0
        %606 = vmatprep.subr.bf16.mxu0 0
        %607 = vmatpush1.bf16.msra.mxu0 0
        %608 = vmatprep.subr.bf16.mxu0 0
        %609 = vmatpush1.bf16.msra.mxu0 0
        %610 = vmatprep.subr.bf16.mxu0 0
        %611 = vmatpush1.bf16.msra.mxu0 0
        %612 = vmatprep.subr.bf16.mxu0 0
        %613 = vmatpush1.bf16.msra.mxu0 0
        %614 = vmatprep.subr.bf16.mxu0 0
        %615 = vmatpush1.bf16.msra.mxu0 0
        %616 = vmatprep.subr.bf16.mxu0 0
        %617 = vmatpush1.bf16.msra.mxu0 0
        %618 = vmatprep.subr.bf16.mxu0 0
        %619 = vmatpush1.bf16.msra.mxu0 0
        %620 = vmatprep.subr.bf16.mxu0 0
        %621 = vmatpush1.bf16.msra.mxu0 0
        %622 = vmatprep.subr.bf16.mxu0 0
        %623 = vmatpush1.bf16.msra.mxu0 0
        %624 = vmatprep.subr.bf16.mxu0 0
        %625 = vmatpush1.bf16.msra.mxu0 0
        %626 = vmatprep.mubr.bf16.mxu0 0
        %627 = vmatmul.mubr.bf16.gmra.mrb[0].mxu0 %v592
        %v628 = vpop.f32.mrb[0].mxu0
        %v629 = vadd.f32 0.0, %v628
        %v630 = vpop.f32.mrb[0].mxu0
        %v631 = vpop.f32.mrb[0].mxu0
        %v632 = vpop.f32.mrb[0].mxu0
        %633 = vdwg.mxu0
        %v634 = vadd.f32 %v511, %v629
        %s635 = scalar_lea.vmem %s225, 12 [#allocation2]
        %v636 = vld [vmem:[%s635] sm:$0xf]
        %v638 = vcombine.low %v636, %v636
        %v640 = vunpack.c.l.s4 1983009808
        %v641 = vunpack.c.0.s8 %v640
        %v642 = vlaneseq
        %v643 = vshrl.u32 %v642, 7
        %v644 = vsub.s32 %v641, %v643
        %v645 = vrot.slane %v638, %v644
        %v647 = vunpack.c.l.s4 1983009808
        %v648 = vunpack.c.0.s8 %v647
        %v649 = vlaneseq
        %v650 = vshrl.u32 %v649, 7
        %v651 = vsub.s32 %v648, %v650
        %v652 = vrot.slane %v636, %v651
        %v653 = vcombine.high %v645, %v645
        %654 = vrot.lane.b32.xlu0 %v645, 127
        %v655 = vpop.permute.xlu0 %654
        %656 = vrot.lane.b32.xlu0 %v653, 127
        %v657 = vpop.permute.xlu0 %656
        %v658 = vsel %vm293, %v655, %v657
        %v659 = vcombine.low %v652, %v652
        %660 = vrot.lane.b32.xlu0 %v659, 123
        %v661 = vpop.permute.xlu0 %660
        %662 = vrot.lane.b32.xlu0 %v652, 123
        %v663 = vpop.permute.xlu0 %662
        %v664 = vsel %vm300, %v661, %v663
        %v665 = vcombine.low %v645, %v645
        %666 = vrot.lane.b32.xlu0 %v665, 122
        %v667 = vpop.permute.xlu0 %666
        %668 = vrot.lane.b32.xlu0 %v645, 122
        %v669 = vpop.permute.xlu0 %668
        %v670 = vsel %vm307, %v667, %v669
        %v671 = vcombine.high %v652, %v652
        %672 = vrot.lane.b32.xlu0 %v652, 103
        %v673 = vpop.permute.xlu0 %672
        %674 = vrot.lane.b32.xlu0 %v671, 103
        %v675 = vpop.permute.xlu0 %674
        %v676 = vsel %vm314, %v673, %v675
        %677 = vrot.lane.b32.xlu0 %v645, 102
        %v678 = vpop.permute.xlu0 %677
        %679 = vrot.lane.b32.xlu0 %v653, 102
        %v680 = vpop.permute.xlu0 %679
        %v681 = vsel %vm320, %v678, %v680
        %682 = vrot.lane.b32.xlu0 %v659, 98
        %v683 = vpop.permute.xlu0 %682
        %684 = vrot.lane.b32.xlu0 %v652, 98
        %v685 = vpop.permute.xlu0 %684
        %v686 = vsel %vm326, %v683, %v685
        %687 = vrot.lane.b32.xlu0 %v665, 97
        %v688 = vpop.permute.xlu0 %687
        %689 = vrot.lane.b32.xlu0 %v645, 97
        %v690 = vpop.permute.xlu0 %689
        %v691 = vsel %vm332, %v688, %v690
        %v694 = vsel %vm334, %v636, %v658
        %v696 = vsel %vm338, %v694, %v664
        %v698 = vsel %vm341, %v696, %v670
        %v702 = vsel %vm334, %v676, %v681
        %v704 = vsel %vm338, %v702, %v686
        %v706 = vsel %vm341, %v704, %v691
        %s708 = scalar_lea.vmem [#allocation5], 12
        %v709 = vld [vmem:[%s708] sm:$0xf]
        %v711 = vsel %vm429, %v709, 0
        %713 = vmatprep.subr.bf16.mxu0 0
        %714 = vmatpush1.bf16.msra.mxu0 %v698
        %715 = vmatprep.subr.bf16.mxu0 0
        %716 = vmatpush1.bf16.msra.mxu0 %v706
        %717 = vmatprep.subr.bf16.mxu0 0
        %718 = vmatpush1.bf16.msra.mxu0 0
        %719 = vmatprep.subr.bf16.mxu0 0
        %720 = vmatpush1.bf16.msra.mxu0 0
        %721 = vmatprep.subr.bf16.mxu0 0
        %722 = vmatpush1.bf16.msra.mxu0 0
        %723 = vmatprep.subr.bf16.mxu0 0
        %724 = vmatpush1.bf16.msra.mxu0 0
        %725 = vmatprep.subr.bf16.mxu0 0
        %726 = vmatpush1.bf16.msra.mxu0 0
        %727 = vmatprep.subr.bf16.mxu0 0
        %728 = vmatpush1.bf16.msra.mxu0 0
        %729 = vmatprep.subr.bf16.mxu0 0
        %730 = vmatpush1.bf16.msra.mxu0 0
        %731 = vmatprep.subr.bf16.mxu0 0
        %732 = vmatpush1.bf16.msra.mxu0 0
        %733 = vmatprep.subr.bf16.mxu0 0
        %734 = vmatpush1.bf16.msra.mxu0 0
        %735 = vmatprep.subr.bf16.mxu0 0
        %736 = vmatpush1.bf16.msra.mxu0 0
        %737 = vmatprep.subr.bf16.mxu0 0
        %738 = vmatpush1.bf16.msra.mxu0 0
        %739 = vmatprep.subr.bf16.mxu0 0
        %740 = vmatpush1.bf16.msra.mxu0 0
        %741 = vmatprep.subr.bf16.mxu0 0
        %742 = vmatpush1.bf16.msra.mxu0 0
        %743 = vmatprep.subr.bf16.mxu0 0
        %744 = vmatpush1.bf16.msra.mxu0 0
        %745 = vmatprep.mubr.bf16.mxu0 0
        %746 = vmatmul.mubr.bf16.gmra.mrb[0].mxu0 %v711
        %v747 = vpop.f32.mrb[0].mxu0
        %v748 = vadd.f32 0.0, %v747
        %v749 = vpop.f32.mrb[0].mxu0
        %v750 = vpop.f32.mrb[0].mxu0
        %v751 = vpop.f32.mrb[0].mxu0
        %752 = vdwg.mxu0
        %v753 = vadd.f32 %v634, %v748
        %s754 = scalar_lea.vmem %s225, 16 [#allocation2]
        %v755 = vld [vmem:[%s754] sm:$0xf]
        %v757 = vcombine.low %v755, %v755
        %v759 = vunpack.c.l.s4 1983009808
        %v760 = vunpack.c.0.s8 %v759
        %v761 = vlaneseq
        %v762 = vshrl.u32 %v761, 7
        %v763 = vsub.s32 %v760, %v762
        %v764 = vrot.slane %v757, %v763
        %v766 = vunpack.c.l.s4 1983009808
        %v767 = vunpack.c.0.s8 %v766
        %v768 = vlaneseq
        %v769 = vshrl.u32 %v768, 7
        %v770 = vsub.s32 %v767, %v769
        %v771 = vrot.slane %v755, %v770
        %v772 = vcombine.high %v764, %v764
        %773 = vrot.lane.b32.xlu0 %v764, 127
        %v774 = vpop.permute.xlu0 %773
        %775 = vrot.lane.b32.xlu0 %v772, 127
        %v776 = vpop.permute.xlu0 %775
        %v777 = vsel %vm293, %v774, %v776
        %v778 = vcombine.low %v771, %v771
        %779 = vrot.lane.b32.xlu0 %v778, 123
        %v780 = vpop.permute.xlu0 %779
        %781 = vrot.lane.b32.xlu0 %v771, 123
        %v782 = vpop.permute.xlu0 %781
        %v783 = vsel %vm300, %v780, %v782
        %v784 = vcombine.low %v764, %v764
        %785 = vrot.lane.b32.xlu0 %v784, 122
        %v786 = vpop.permute.xlu0 %785
        %787 = vrot.lane.b32.xlu0 %v764, 122
        %v788 = vpop.permute.xlu0 %787
        %v789 = vsel %vm307, %v786, %v788
        %v790 = vcombine.high %v771, %v771
        %791 = vrot.lane.b32.xlu0 %v771, 103
        %v792 = vpop.permute.xlu0 %791
        %793 = vrot.lane.b32.xlu0 %v790, 103
        %v794 = vpop.permute.xlu0 %793
        %v795 = vsel %vm314, %v792, %v794
        %796 = vrot.lane.b32.xlu0 %v764, 102
        %v797 = vpop.permute.xlu0 %796
        %798 = vrot.lane.b32.xlu0 %v772, 102
        %v799 = vpop.permute.xlu0 %798
        %v800 = vsel %vm320, %v797, %v799
        %801 = vrot.lane.b32.xlu0 %v778, 98
        %v802 = vpop.permute.xlu0 %801
        %803 = vrot.lane.b32.xlu0 %v771, 98
        %v804 = vpop.permute.xlu0 %803
        %v805 = vsel %vm326, %v802, %v804
        %806 = vrot.lane.b32.xlu0 %v784, 97
        %v807 = vpop.permute.xlu0 %806
        %808 = vrot.lane.b32.xlu0 %v764, 97
        %v809 = vpop.permute.xlu0 %808
        %v810 = vsel %vm332, %v807, %v809
        %v813 = vsel %vm334, %v755, %v777
        %v815 = vsel %vm338, %v813, %v783
        %v817 = vsel %vm341, %v815, %v789
        %v821 = vsel %vm334, %v795, %v800
        %v823 = vsel %vm338, %v821, %v805
        %v825 = vsel %vm341, %v823, %v810
        %s827 = scalar_lea.vmem [#allocation5], 16
        %v828 = vld [vmem:[%s827] sm:$0xf]
        %v830 = vsel %vm429, %v828, 0
        %832 = vmatprep.subr.bf16.mxu0 0
        %833 = vmatpush1.bf16.msra.mxu0 %v817
        %834 = vmatprep.subr.bf16.mxu0 0
        %835 = vmatpush1.bf16.msra.mxu0 %v825
        %836 = vmatprep.subr.bf16.mxu0 0
        %837 = vmatpush1.bf16.msra.mxu0 0
        %838 = vmatprep.subr.bf16.mxu0 0
        %839 = vmatpush1.bf16.msra.mxu0 0
        %840 = vmatprep.subr.bf16.mxu0 0
        %841 = vmatpush1.bf16.msra.mxu0 0
        %842 = vmatprep.subr.bf16.mxu0 0
        %843 = vmatpush1.bf16.msra.mxu0 0
        %844 = vmatprep.subr.bf16.mxu0 0
        %845 = vmatpush1.bf16.msra.mxu0 0
        %846 = vmatprep.subr.bf16.mxu0 0
        %847 = vmatpush1.bf16.msra.mxu0 0
        %848 = vmatprep.subr.bf16.mxu0 0
        %849 = vmatpush1.bf16.msra.mxu0 0
        %850 = vmatprep.subr.bf16.mxu0 0
        %851 = vmatpush1.bf16.msra.mxu0 0
        %852 = vmatprep.subr.bf16.mxu0 0
        %853 = vmatpush1.bf16.msra.mxu0 0
        %854 = vmatprep.subr.bf16.mxu0 0
        %855 = vmatpush1.bf16.msra.mxu0 0
        %856 = vmatprep.subr.bf16.mxu0 0
        %857 = vmatpush1.bf16.msra.mxu0 0
        %858 = vmatprep.subr.bf16.mxu0 0
        %859 = vmatpush1.bf16.msra.mxu0 0
        %860 = vmatprep.subr.bf16.mxu0 0
        %861 = vmatpush1.bf16.msra.mxu0 0
        %862 = vmatprep.subr.bf16.mxu0 0
        %863 = vmatpush1.bf16.msra.mxu0 0
        %864 = vmatprep.mubr.bf16.mxu0 0
        %865 = vmatmul.mubr.bf16.gmra.mrb[0].mxu0 %v830
        %v866 = vpop.f32.mrb[0].mxu0
        %v867 = vadd.f32 0.0, %v866
        %v868 = vpop.f32.mrb[0].mxu0
        %v869 = vpop.f32.mrb[0].mxu0
        %v870 = vpop.f32.mrb[0].mxu0
        %871 = vdwg.mxu0
        %v872 = vadd.f32 %v753, %v867
        %s873 = scalar_lea.vmem %s225, 20 [#allocation2]
        %v874 = vld [vmem:[%s873] sm:$0xf]
        %v876 = vcombine.low %v874, %v874
        %v878 = vunpack.c.l.s4 1983009808
        %v879 = vunpack.c.0.s8 %v878
        %v880 = vlaneseq
        %v881 = vshrl.u32 %v880, 7
        %v882 = vsub.s32 %v879, %v881
        %v883 = vrot.slane %v876, %v882
        %v885 = vunpack.c.l.s4 1983009808
        %v886 = vunpack.c.0.s8 %v885
        %v887 = vlaneseq
        %v888 = vshrl.u32 %v887, 7
        %v889 = vsub.s32 %v886, %v888
        %v890 = vrot.slane %v874, %v889
        %v891 = vcombine.high %v883, %v883
        %892 = vrot.lane.b32.xlu0 %v883, 127
        %v893 = vpop.permute.xlu0 %892
        %894 = vrot.lane.b32.xlu0 %v891, 127
        %v895 = vpop.permute.xlu0 %894
        %v896 = vsel %vm293, %v893, %v895
        %v897 = vcombine.low %v890, %v890
        %898 = vrot.lane.b32.xlu0 %v897, 123
        %v899 = vpop.permute.xlu0 %898
        %900 = vrot.lane.b32.xlu0 %v890, 123
        %v901 = vpop.permute.xlu0 %900
        %v902 = vsel %vm300, %v899, %v901
        %v903 = vcombine.low %v883, %v883
        %904 = vrot.lane.b32.xlu0 %v903, 122
        %v905 = vpop.permute.xlu0 %904
        %906 = vrot.lane.b32.xlu0 %v883, 122
        %v907 = vpop.permute.xlu0 %906
        %v908 = vsel %vm307, %v905, %v907
        %v909 = vcombine.high %v890, %v890
        %910 = vrot.lane.b32.xlu0 %v890, 103
        %v911 = vpop.permute.xlu0 %910
        %912 = vrot.lane.b32.xlu0 %v909, 103
        %v913 = vpop.permute.xlu0 %912
        %v914 = vsel %vm314, %v911, %v913
        %915 = vrot.lane.b32.xlu0 %v883, 102
        %v916 = vpop.permute.xlu0 %915
        %917 = vrot.lane.b32.xlu0 %v891, 102
        %v918 = vpop.permute.xlu0 %917
        %v919 = vsel %vm320, %v916, %v918
        %920 = vrot.lane.b32.xlu0 %v897, 98
        %v921 = vpop.permute.xlu0 %920
        %922 = vrot.lane.b32.xlu0 %v890, 98
        %v923 = vpop.permute.xlu0 %922
        %v924 = vsel %vm326, %v921, %v923
        %925 = vrot.lane.b32.xlu0 %v903, 97
        %v926 = vpop.permute.xlu0 %925
        %927 = vrot.lane.b32.xlu0 %v883, 97
        %v928 = vpop.permute.xlu0 %927
        %v929 = vsel %vm332, %v926, %v928
        %v932 = vsel %vm334, %v874, %v896
        %v934 = vsel %vm338, %v932, %v902
        %v936 = vsel %vm341, %v934, %v908
        %v940 = vsel %vm334, %v914, %v919
        %v942 = vsel %vm338, %v940, %v924
        %v944 = vsel %vm341, %v942, %v929
        %s946 = scalar_lea.vmem [#allocation5], 20
        %v947 = vld [vmem:[%s946] sm:$0xf]
        %v949 = vsel %vm429, %v947, 0
        %951 = vmatprep.subr.bf16.mxu0 0
        %952 = vmatpush1.bf16.msra.mxu0 %v936
        %953 = vmatprep.subr.bf16.mxu0 0
        %954 = vmatpush1.bf16.msra.mxu0 %v944
        %955 = vmatprep.subr.bf16.mxu0 0
        %956 = vmatpush1.bf16.msra.mxu0 0
        %957 = vmatprep.subr.bf16.mxu0 0
        %958 = vmatpush1.bf16.msra.mxu0 0
        %959 = vmatprep.subr.bf16.mxu0 0
        %960 = vmatpush1.bf16.msra.mxu0 0
        %961 = vmatprep.subr.bf16.mxu0 0
        %962 = vmatpush1.bf16.msra.mxu0 0
        %963 = vmatprep.subr.bf16.mxu0 0
        %964 = vmatpush1.bf16.msra.mxu0 0
        %965 = vmatprep.subr.bf16.mxu0 0
        %966 = vmatpush1.bf16.msra.mxu0 0
        %967 = vmatprep.subr.bf16.mxu0 0
        %968 = vmatpush1.bf16.msra.mxu0 0
        %969 = vmatprep.subr.bf16.mxu0 0
        %970 = vmatpush1.bf16.msra.mxu0 0
        %971 = vmatprep.subr.bf16.mxu0 0
        %972 = vmatpush1.bf16.msra.mxu0 0
        %973 = vmatprep.subr.bf16.mxu0 0
        %974 = vmatpush1.bf16.msra.mxu0 0
        %975 = vmatprep.subr.bf16.mxu0 0
        %976 = vmatpush1.bf16.msra.mxu0 0
        %977 = vmatprep.subr.bf16.mxu0 0
        %978 = vmatpush1.bf16.msra.mxu0 0
        %979 = vmatprep.subr.bf16.mxu0 0
        %980 = vmatpush1.bf16.msra.mxu0 0
        %981 = vmatprep.subr.bf16.mxu0 0
        %982 = vmatpush1.bf16.msra.mxu0 0
        %983 = vmatprep.mubr.bf16.mxu0 0
        %984 = vmatmul.mubr.bf16.gmra.mrb[0].mxu0 %v949
        %v985 = vpop.f32.mrb[0].mxu0
        %v986 = vadd.f32 0.0, %v985
        %v987 = vpop.f32.mrb[0].mxu0
        %v988 = vpop.f32.mrb[0].mxu0
        %v989 = vpop.f32.mrb[0].mxu0
        %990 = vdwg.mxu0
        %v991 = vadd.f32 %v872, %v986
        %s992 = scalar_lea.vmem %s225, 24 [#allocation2]
        %v993 = vld [vmem:[%s992] sm:$0xf]
        %v995 = vcombine.low %v993, %v993
        %v997 = vunpack.c.l.s4 1983009808
        %v998 = vunpack.c.0.s8 %v997
        %v999 = vlaneseq
        %v1000 = vshrl.u32 %v999, 7
        %v1001 = vsub.s32 %v998, %v1000
        %v1002 = vrot.slane %v995, %v1001
        %v1004 = vunpack.c.l.s4 1983009808
        %v1005 = vunpack.c.0.s8 %v1004
        %v1006 = vlaneseq
        %v1007 = vshrl.u32 %v1006, 7
        %v1008 = vsub.s32 %v1005, %v1007
        %v1009 = vrot.slane %v993, %v1008
        %v1010 = vcombine.high %v1002, %v1002
        %1011 = vrot.lane.b32.xlu0 %v1002, 127
        %v1012 = vpop.permute.xlu0 %1011
        %1013 = vrot.lane.b32.xlu0 %v1010, 127
        %v1014 = vpop.permute.xlu0 %1013
        %v1015 = vsel %vm293, %v1012, %v1014
        %v1016 = vcombine.low %v1009, %v1009
        %1017 = vrot.lane.b32.xlu0 %v1016, 123
        %v1018 = vpop.permute.xlu0 %1017
        %1019 = vrot.lane.b32.xlu0 %v1009, 123
        %v1020 = vpop.permute.xlu0 %1019
        %v1021 = vsel %vm300, %v1018, %v1020
        %v1022 = vcombine.low %v1002, %v1002
        %1023 = vrot.lane.b32.xlu0 %v1022, 122
        %v1024 = vpop.permute.xlu0 %1023
        %1025 = vrot.lane.b32.xlu0 %v1002, 122
        %v1026 = vpop.permute.xlu0 %1025
        %v1027 = vsel %vm307, %v1024, %v1026
        %v1028 = vcombine.high %v1009, %v1009
        %1029 = vrot.lane.b32.xlu0 %v1009, 103
        %v1030 = vpop.permute.xlu0 %1029
        %1031 = vrot.lane.b32.xlu0 %v1028, 103
        %v1032 = vpop.permute.xlu0 %1031
        %v1033 = vsel %vm314, %v1030, %v1032
        %1034 = vrot.lane.b32.xlu0 %v1002, 102
        %v1035 = vpop.permute.xlu0 %1034
        %1036 = vrot.lane.b32.xlu0 %v1010, 102
        %v1037 = vpop.permute.xlu0 %1036
        %v1038 = vsel %vm320, %v1035, %v1037
        %1039 = vrot.lane.b32.xlu0 %v1016, 98
        %v1040 = vpop.permute.xlu0 %1039
        %1041 = vrot.lane.b32.xlu0 %v1009, 98
        %v1042 = vpop.permute.xlu0 %1041
        %v1043 = vsel %vm326, %v1040, %v1042
        %1044 = vrot.lane.b32.xlu0 %v1022, 97
        %v1045 = vpop.permute.xlu0 %1044
        %1046 = vrot.lane.b32.xlu0 %v1002, 97
        %v1047 = vpop.permute.xlu0 %1046
        %v1048 = vsel %vm332, %v1045, %v1047
        %v1051 = vsel %vm334, %v993, %v1015
        %v1053 = vsel %vm338, %v1051, %v1021
        %v1055 = vsel %vm341, %v1053, %v1027
        %v1059 = vsel %vm334, %v1033, %v1038
        %v1061 = vsel %vm338, %v1059, %v1043
        %v1063 = vsel %vm341, %v1061, %v1048
        %s1065 = scalar_lea.vmem [#allocation5], 24
        %v1066 = vld [vmem:[%s1065] sm:$0xf]
        %v1068 = vsel %vm429, %v1066, 0
        %1070 = vmatprep.subr.bf16.mxu0 0
        %1071 = vmatpush1.bf16.msra.mxu0 %v1055
        %1072 = vmatprep.subr.bf16.mxu0 0
        %1073 = vmatpush1.bf16.msra.mxu0 %v1063
        %1074 = vmatprep.subr.bf16.mxu0 0
        %1075 = vmatpush1.bf16.msra.mxu0 0
        %1076 = vmatprep.subr.bf16.mxu0 0
        %1077 = vmatpush1.bf16.msra.mxu0 0
        %1078 = vmatprep.subr.bf16.mxu0 0
        %1079 = vmatpush1.bf16.msra.mxu0 0
        %1080 = vmatprep.subr.bf16.mxu0 0
        %1081 = vmatpush1.bf16.msra.mxu0 0
        %1082 = vmatprep.subr.bf16.mxu0 0
        %1083 = vmatpush1.bf16.msra.mxu0 0
        %1084 = vmatprep.subr.bf16.mxu0 0
        %1085 = vmatpush1.bf16.msra.mxu0 0
        %1086 = vmatprep.subr.bf16.mxu0 0
        %1087 = vmatpush1.bf16.msra.mxu0 0
        %1088 = vmatprep.subr.bf16.mxu0 0
        %1089 = vmatpush1.bf16.msra.mxu0 0
        %1090 = vmatprep.subr.bf16.mxu0 0
        %1091 = vmatpush1.bf16.msra.mxu0 0
        %1092 = vmatprep.subr.bf16.mxu0 0
        %1093 = vmatpush1.bf16.msra.mxu0 0
        %1094 = vmatprep.subr.bf16.mxu0 0
        %1095 = vmatpush1.bf16.msra.mxu0 0
        %1096 = vmatprep.subr.bf16.mxu0 0
        %1097 = vmatpush1.bf16.msra.mxu0 0
        %1098 = vmatprep.subr.bf16.mxu0 0
        %1099 = vmatpush1.bf16.msra.mxu0 0
        %1100 = vmatprep.subr.bf16.mxu0 0
        %1101 = vmatpush1.bf16.msra.mxu0 0
        %1102 = vmatprep.mubr.bf16.mxu0 0
        %1103 = vmatmul.mubr.bf16.gmra.mrb[0].mxu0 %v1068
        %v1104 = vpop.f32.mrb[0].mxu0
        %v1105 = vadd.f32 0.0, %v1104
        %v1106 = vpop.f32.mrb[0].mxu0
        %v1107 = vpop.f32.mrb[0].mxu0
        %v1108 = vpop.f32.mrb[0].mxu0
        %1109 = vdwg.mxu0
        %v1110 = vadd.f32 %v991, %v1105
        %s1111 = scalar_lea.vmem %s225, 28 [#allocation2]
        %v1112 = vld [vmem:[%s1111] sm:$0xf]
        %v1114 = vcombine.low %v1112, %v1112
        %v1116 = vunpack.c.l.s4 1983009808
        %v1117 = vunpack.c.0.s8 %v1116
        %v1118 = vlaneseq
        %v1119 = vshrl.u32 %v1118, 7
        %v1120 = vsub.s32 %v1117, %v1119
        %v1121 = vrot.slane %v1114, %v1120
        %v1123 = vunpack.c.l.s4 1983009808
        %v1124 = vunpack.c.0.s8 %v1123
        %v1125 = vlaneseq
        %v1126 = vshrl.u32 %v1125, 7
        %v1127 = vsub.s32 %v1124, %v1126
        %v1128 = vrot.slane %v1112, %v1127
        %v1129 = vcombine.high %v1121, %v1121
        %1130 = vrot.lane.b32.xlu0 %v1121, 127
        %v1131 = vpop.permute.xlu0 %1130
        %1132 = vrot.lane.b32.xlu0 %v1129, 127
        %v1133 = vpop.permute.xlu0 %1132
        %v1134 = vsel %vm293, %v1131, %v1133
        %v1135 = vcombine.low %v1128, %v1128
        %1136 = vrot.lane.b32.xlu0 %v1135, 123
        %v1137 = vpop.permute.xlu0 %1136
        %1138 = vrot.lane.b32.xlu0 %v1128, 123
        %v1139 = vpop.permute.xlu0 %1138
        %v1140 = vsel %vm300, %v1137, %v1139
        %v1141 = vcombine.low %v1121, %v1121
        %1142 = vrot.lane.b32.xlu0 %v1141, 122
        %v1143 = vpop.permute.xlu0 %1142
        %1144 = vrot.lane.b32.xlu0 %v1121, 122
        %v1145 = vpop.permute.xlu0 %1144
        %v1146 = vsel %vm307, %v1143, %v1145
        %v1147 = vcombine.high %v1128, %v1128
        %1148 = vrot.lane.b32.xlu0 %v1128, 103
        %v1149 = vpop.permute.xlu0 %1148
        %1150 = vrot.lane.b32.xlu0 %v1147, 103
        %v1151 = vpop.permute.xlu0 %1150
        %v1152 = vsel %vm314, %v1149, %v1151
        %1153 = vrot.lane.b32.xlu0 %v1121, 102
        %v1154 = vpop.permute.xlu0 %1153
        %1155 = vrot.lane.b32.xlu0 %v1129, 102
        %v1156 = vpop.permute.xlu0 %1155
        %v1157 = vsel %vm320, %v1154, %v1156
        %1158 = vrot.lane.b32.xlu0 %v1135, 98
        %v1159 = vpop.permute.xlu0 %1158
        %1160 = vrot.lane.b32.xlu0 %v1128, 98
        %v1161 = vpop.permute.xlu0 %1160
        %v1162 = vsel %vm326, %v1159, %v1161
        %1163 = vrot.lane.b32.xlu0 %v1141, 97
        %v1164 = vpop.permute.xlu0 %1163
        %1165 = vrot.lane.b32.xlu0 %v1121, 97
        %v1166 = vpop.permute.xlu0 %1165
        %v1167 = vsel %vm332, %v1164, %v1166
        %v1170 = vsel %vm334, %v1112, %v1134
        %v1172 = vsel %vm338, %v1170, %v1140
        %v1174 = vsel %vm341, %v1172, %v1146
        %v1178 = vsel %vm334, %v1152, %v1157
        %v1180 = vsel %vm338, %v1178, %v1162
        %v1182 = vsel %vm341, %v1180, %v1167
        %s1184 = scalar_lea.vmem [#allocation5], 28
        %v1185 = vld [vmem:[%s1184] sm:$0xf]
        %v1187 = vsel %vm429, %v1185, 0
        %1189 = vmatprep.subr.bf16.mxu0 0
        %1190 = vmatpush1.bf16.msra.mxu0 %v1174
        %1191 = vmatprep.subr.bf16.mxu0 0
        %1192 = vmatpush1.bf16.msra.mxu0 %v1182
        %1193 = vmatprep.subr.bf16.mxu0 0
        %1194 = vmatpush1.bf16.msra.mxu0 0
        %1195 = vmatprep.subr.bf16.mxu0 0
        %1196 = vmatpush1.bf16.msra.mxu0 0
        %1197 = vmatprep.subr.bf16.mxu0 0
        %1198 = vmatpush1.bf16.msra.mxu0 0
        %1199 = vmatprep.subr.bf16.mxu0 0
        %1200 = vmatpush1.bf16.msra.mxu0 0
        %1201 = vmatprep.subr.bf16.mxu0 0
        %1202 = vmatpush1.bf16.msra.mxu0 0
        %1203 = vmatprep.subr.bf16.mxu0 0
        %1204 = vmatpush1.bf16.msra.mxu0 0
        %1205 = vmatprep.subr.bf16.mxu0 0
        %1206 = vmatpush1.bf16.msra.mxu0 0
        %1207 = vmatprep.subr.bf16.mxu0 0
        %1208 = vmatpush1.bf16.msra.mxu0 0
        %1209 = vmatprep.subr.bf16.mxu0 0
        %1210 = vmatpush1.bf16.msra.mxu0 0
        %1211 = vmatprep.subr.bf16.mxu0 0
        %1212 = vmatpush1.bf16.msra.mxu0 0
        %1213 = vmatprep.subr.bf16.mxu0 0
        %1214 = vmatpush1.bf16.msra.mxu0 0
        %1215 = vmatprep.subr.bf16.mxu0 0
        %1216 = vmatpush1.bf16.msra.mxu0 0
        %1217 = vmatprep.subr.bf16.mxu0 0
        %1218 = vmatpush1.bf16.msra.mxu0 0
        %1219 = vmatprep.subr.bf16.mxu0 0
        %1220 = vmatpush1.bf16.msra.mxu0 0
        %1221 = vmatprep.mubr.bf16.mxu0 0
        %1222 = vmatmul.mubr.bf16.gmra.mrb[0].mxu0 %v1187
        %v1223 = vpop.f32.mrb[0].mxu0
        %v1224 = vadd.f32 0.0, %v1223
        %v1225 = vpop.f32.mrb[0].mxu0
        %v1226 = vpop.f32.mrb[0].mxu0
        %v1227 = vpop.f32.mrb[0].mxu0
        %1228 = vdwg.mxu0
        %v1229 = vadd.f32 %v1110, %v1224
        %v1230 = vld [vmem:[%s2] sm:$0x1]
        %v1232 = vlaneseq
        %v1233 = vshrl.u32 %v1232, 7
        %v1234 = vsub.s32 0, %v1233
        %v1235 = vrot.slane %v1230, %v1234
        %v1237 = vmul.f32 %v1229, %v1235
        %1238 = vadd.xlane.f32.xlu0 %v1237
        %v1239 = vpop.xlane.xlu0 %1238
        %v1240 = vmul.f32 %v1237, %v1229
        %1241 = vadd.xlane.f32.xlu0 %v1240
        %v1242 = vpop.xlane.xlu0 %1241
        %1243 = vst [vmem:[%s251] sm:$0xff] %v1229
        %vm1244 = vcmask 7168
        %v1245 = vsel %vm1244, %v1239, %v1242
        %vm1246 = vcmask 15360
        %1247 = vst.msk [vmem:[%s269] sm:$0xff] %vm1246, %v1245
        %s1248 = sand.u32 %s115, 1
        %s1249 = scalar_lea.sflag [#allocation4], %s1248
        %s1250 = sand.u32 %s115, 1
        %s1251 = smul.addr %s1250, 8
        %s1252 = scalar_lea.vmem [#allocation7], %s1251
        %p1253 = scmp.lt.s32.totalorder %s27, 1
        %s1254 = scalar_select %p1253, %s27, 1
        %p1255 = scmp.lt.s32.totalorder %s28, 1
        %s1256 = scalar_select %p1255, %s28, 1
        %s1257 = smul.addr %s1254, 2
        %s1258 = sadd.s32 %s1256, %s1257
        %s1259 = smul.addr %s1258, 8
        %s1260 = scalar_lea.vmem %s4, %s1259
        // Predicated region
        $region41: #{tpu_custom_call.1} parent=31 // pred_check
          %p1261 = pneg %p125
        $region42: #{tpu_custom_call.1} parent=31 // pred_check_branch
          %1263 = sbr.rel (%p1261) target = $region44
        $region43: #{tpu_custom_call.1} parent=31 // pred_region
          %s1265 = ssub.s32 128, 128
          %1266 = vsyncadd %s1249, %s1265
          %s1267 = smul.addr %s27, 2
          %s1268 = sadd.s32 %s28, %s1267
          %s1269 = smul.addr %s1268, 128
          %s1270 = scalar_lea.hbm %s3, %s1269
          %s1272 = sshll.u32 %s1252, 4
          %s1273 = int_to_ptr.vmem [resolvable:$true] %s1272
          %1275 = dma.vmem_to_hbm [thread:$0]  %s1273, 128, %s1270, %s1249
        $region44: #{tpu_custom_call.1} parent=31 // pred_fallthru
          _
        // Predicated region
        $region45: #{tpu_custom_call.1} parent=31 // pred_check
          %p1276 = pneg %p153
        $region46: #{tpu_custom_call.1} parent=31 // pred_check_branch
          %1278 = sbr.rel (%p1276) target = $region48
        $region47: #{tpu_custom_call.1} parent=31 // pred_region
          _
        $region48: #{tpu_custom_call.1} parent=31 // pred_fallthru
          _
      $region32: #{tpu_custom_call.1} parent=5 // pred_fallthru
        _
      %p1279 = scmp.le.s32.totalorder 2, %s18
      // Predicated region
      $region49: #{tpu_custom_call.1} parent=5 // pred_check
        %p1280 = pneg %p1279
      $region50: #{tpu_custom_call.1} parent=5 // pred_check_branch
        %1282 = sbr.rel (%p1280) target = $region52
      $region51: #{tpu_custom_call.1} parent=5 // pred_region
        %s1283 = ssub.s32 %s18, 2
        // Predicated region
        $region53: #{tpu_custom_call.1} parent=51 // pred_check
          %p1284 = pneg %p131
        $region54: #{tpu_custom_call.1} parent=51 // pred_check_branch
          %1286 = sbr.rel (%p1284) target = $region56
        $region55: #{tpu_custom_call.1} parent=51 // pred_region
          %s1287 = sand.u32 %s116, 1
          %s1288 = scalar_lea.sflag [#allocation4], %s1287
          %s1289 = sand.u32 %s116, 1
          %s1290 = smul.addr %s1289, 8
          %s1291 = scalar_lea.vmem [#allocation7], %s1290
          %1292 = dma.done %s1288, 128
        $region56: #{tpu_custom_call.1} parent=51 // pred_fallthru
          _
        // Predicated region
        $region57: #{tpu_custom_call.1} parent=51 // pred_check
          %p1293 = pneg %p159
        $region58: #{tpu_custom_call.1} parent=51 // pred_check_branch
          %1295 = sbr.rel (%p1293) target = $region60
        $region59: #{tpu_custom_call.1} parent=51 // pred_region
          %p1296 = scmp.lt.s32.totalorder %s29, 1
          %s1297 = scalar_select %p1296, %s29, 1
          %p1298 = scmp.lt.s32.totalorder %s30, 1
          %s1299 = scalar_select %p1298, %s30, 1
          %s1300 = smul.addr %s1297, 2
          %s1301 = sadd.s32 %s1299, %s1300
          %s1302 = smul.addr %s1301, 8
          %s1303 = scalar_lea.vmem %s4, %s1302
        $region60: #{tpu_custom_call.1} parent=51 // pred_fallthru
          _
      $region52: #{tpu_custom_call.1} parent=5 // pred_fallthru
        _
    $region6: #{tpu_custom_call.1} parent=1 // loop_footer
      %s22 = sadd.s32 1, %s18
    $region7: #{tpu_custom_call.1} parent=1 // loop_footer_branch
      %17 = sbr.rel target = $region3
    $region8: #{tpu_custom_call.1} parent=1 // loop_exit
      _
    %1304 = vsyncpa [#allocation3], 1
    %s1305 = scalar_lea.sflag [#allocation3], 1
    %1306 = vsyncpa %s1305, 1
    %1307 = vsyncpa [#allocation6], 1
    %1308 = vsyncpa [#allocation4], 1
    %s1309 = scalar_lea.sflag [#allocation4], 1
    %1310 = vsyncpa %s1309, 1

</llo_original>
